<compile_context>
chip_gen: v5e
topology: v5e:2x2
jax: 0.10.0
libtpu: 0.0.40
codegen_flags: <defaults>
</compile_context>

<pallas_src>
import jax
import jax.numpy as jnp
from jax.experimental import pallas as pl
from jax.experimental.pallas import tpu as pltpu

IN_DIM = 28 * 28   # 784
H1 = 256
LATENT = 64


def _round_up(x, m):
    return ((x + m - 1) // m) * m


# ----------------------------------------------------------------------------
# Kernel
# ----------------------------------------------------------------------------
def autoencoder_kernel(x_ref,
                       w1_ref, b1_ref,
                       w23_ref, b23_ref,
                       w4_ref, b4_ref,
                       out_ref):
    # x tile: (TB, 784) bf16; weights bf16 (in, out); biases f32 (1, out).
    x = x_ref[...]

    # encoder: Linear(784, 256) + ReLU
    h1 = jnp.dot(x, w1_ref[...], preferred_element_type=jnp.float32) + b1_ref[...]
    h1 = jnp.maximum(h1, 0.0)

    # encoder Linear(256,64) + decoder Linear(64,256) folded into one 256x256
    # matmul (mathematically identical; no activation between them), then ReLU.
    h2 = jnp.dot(h1.astype(jnp.bfloat16), w23_ref[...],
                 preferred_element_type=jnp.float32) + b23_ref[...]
    h2 = jnp.maximum(h2, 0.0)

    # decoder: Linear(256, 784) + Sigmoid
    logits = jnp.dot(h2.astype(jnp.bfloat16), w4_ref[...],
                     preferred_element_type=jnp.float32) + b4_ref[...]
    # sigmoid = 1 / (1 + exp(-x)); exp + approx reciprocal both go to the EUP.
    out_ref[...] = pl.reciprocal(1.0 + jnp.exp(-logits),
                                 approx=True).astype(out_ref.dtype)


# ----------------------------------------------------------------------------
# Parameters
# ----------------------------------------------------------------------------
def make_params(key):
    """PyTorch-style init U(-1/sqrt(fan_in), 1/sqrt(fan_in)).

    Weights are stored transposed vs PyTorch, i.e. W has shape
    (in_features, out_features) so the forward computes x @ W + b.
    """
    dims = [(IN_DIM, H1), (H1, LATENT), (LATENT, H1), (H1, IN_DIM)]
    params = []
    for (fan_in, fan_out) in dims:
        key, kw, kb = jax.random.split(key, 3)
        bound = 1.0 / (fan_in ** 0.5)
        w = jax.random.uniform(kw, (fan_in, fan_out), jnp.float32, -bound, bound)
        b = jax.random.uniform(kb, (1, fan_out), jnp.float32, -bound, bound)
        params += [w, b]
    return params


def prepare_params(params):
    """One-time param preparation (cache the result across forward calls).

    * Folds the activation-free bottleneck: W23 = W2 @ W3, b23 = b2 @ W3 + b3.
    * Casts weights to bf16 (half the resident-weight DMA, native bf16 MXU).
    Biases stay f32.
    """
    w1, b1, w2, b2, w3, b3, w4, b4 = params
    w23 = jnp.dot(w2, w3, preferred_element_type=jnp.float32)
    b23 = jnp.dot(b2, w3, preferred_element_type=jnp.float32) + b3
    return (w1.astype(jnp.bfloat16), b1,
            w23.astype(jnp.bfloat16), b23,
            w4.astype(jnp.bfloat16), b4)


# ----------------------------------------------------------------------------
# Forward
# ----------------------------------------------------------------------------
def autoencoder_forward(x, prepped_params, *, tb=512, out_dtype=jnp.bfloat16):
    """x: (B, 784); prepped_params: output of prepare_params()."""
    w1, b1, w23, b23, w4, b4 = prepped_params
    B = x.shape[0]

    # bf16 activation input: halves the input-tile DMA of a mem-bound kernel
    # (numerics unchanged — the MXU path is bf16 either way).
    x = x.astype(jnp.bfloat16)

    # ---- batch tiling ----
    # Multiple of 8; large tiles when possible (amortize ~0.35us/step on
    # v5e/v6e) but at least ~4 grid steps when the batch allows so the
    # "parallel" axis spans both v7x TensorCores and the pipeline overlaps.
    B8 = _round_up(B, 8)
    tb = _round_up(max(tb, 8), 8)
    tb = min(tb, max(8, _round_up(pl.cdiv(B8, 4), 8)))
    TB = min(tb, B8)
    n_tiles = pl.cdiv(B8, TB)
    Bp = n_tiles * TB
    if Bp != B:
        # Only for ragged batches; the feature dim is never padded/sliced.
        x = jnp.pad(x, ((0, Bp - B), (0, 0)))

    def resident(shape):
        # constant index_map -> fetched once, stays resident in VMEM
        return pl.BlockSpec(shape, lambda i: (0, 0))

    out = pl.pallas_call(
        autoencoder_kernel,
        out_shape=jax.ShapeDtypeStruct((Bp, IN_DIM), out_dtype),
        grid=(n_tiles,),
        in_specs=[
            pl.BlockSpec((TB, IN_DIM), lambda i: (i, 0)),   # x tile (pipelined)
            resident(w1.shape), resident(b1.shape),
            resident(w23.shape), resident(b23.shape),
            resident(w4.shape), resident(b4.shape),
        ],
        out_specs=pl.BlockSpec((TB, IN_DIM), lambda i: (i, 0)),
        compiler_params=pltpu.CompilerParams(
            dimension_semantics=("parallel",),      # shard batch tiles over TCs
            vmem_limit_bytes=32 * 1024 * 1024,      # ample for TB<=512 everywhere
        ),
    )(x, w1, b1, w23, b23, w4, b4)

    if Bp != B:
        out = out[:B]
    return out


def autoencoder_ref(x, params):
    w1, b1, w2, b2, w3, b3, w4, b4 = params
    h1 = jnp.maximum(x @ w1 + b1, 0.0)
    z = h1 @ w2 + b2
    h2 = jnp.maximum(z @ w3 + b3, 0.0)
    return jax.nn.sigmoid(h2 @ w4 + b4)


if __name__ == "__main__":
    key = jax.random.PRNGKey(0)
    key, kx = jax.random.split(key)

    B = 16
    x = jax.random.uniform(kx, (B, IN_DIM), jnp.float32)   # like normalized MNIST pixels
    params = make_params(key)

    prepped = prepare_params(params)          # one-time weight prep (cacheable)
    fwd = jax.jit(autoencoder_forward)
    out = fwd(x, prepped)
    jax.block_until_ready(out)

    ref = autoencoder_ref(x, params)          # f32 reference
    assert out.shape == (B, IN_DIM)
    # tolerance covers bf16 activations/weights/output, the folded bottleneck
    # matmul, and the approx-reciprocal sigmoid
    assert jnp.allclose(out.astype(jnp.float32), ref, atol=1e-2, rtol=1e-2)

    print("KERNEL_OK")
</pallas_src>

<mosaic_0001>
module attributes {stable_mosaic.version = 11 : i64} {
  func.func @autoencoder_kernel(%arg0: i32, %arg1: memref<8x784xbf16, #tpu.memory_space<vmem>>, %arg2: memref<784x256xbf16, #tpu.memory_space<vmem>>, %arg3: memref<1x256xf32, #tpu.memory_space<vmem>>, %arg4: memref<256x256xbf16, #tpu.memory_space<vmem>>, %arg5: memref<1x256xf32, #tpu.memory_space<vmem>>, %arg6: memref<256x784xbf16, #tpu.memory_space<vmem>>, %arg7: memref<1x784xf32, #tpu.memory_space<vmem>>, %arg8: memref<8x784xbf16, #tpu.memory_space<vmem>>) attributes {dimension_semantics = [#tpu.dimension_semantics<parallel>], iteration_bounds = array<i64: 2>, scalar_prefetch = 0 : i64, scratch_operands = 0 : i64, tpu.core_type = #tpu.core_type<tc>, window_params = [{transform_indices = @transform_0, window_bounds = array<i64: 8, 784>}, {pipeline_mode = #tpu.pipeline_mode<synchronous>, transform_indices = @transform_1, window_bounds = array<i64: 784, 256>}, {pipeline_mode = #tpu.pipeline_mode<synchronous>, transform_indices = @transform_2, window_bounds = array<i64: 1, 256>}, {pipeline_mode = #tpu.pipeline_mode<synchronous>, transform_indices = @transform_3, window_bounds = array<i64: 256, 256>}, {pipeline_mode = #tpu.pipeline_mode<synchronous>, transform_indices = @transform_4, window_bounds = array<i64: 1, 256>}, {pipeline_mode = #tpu.pipeline_mode<synchronous>, transform_indices = @transform_5, window_bounds = array<i64: 256, 784>}, {pipeline_mode = #tpu.pipeline_mode<synchronous>, transform_indices = @transform_6, window_bounds = array<i64: 1, 784>}, {transform_indices = @transform_7, window_bounds = array<i64: 8, 784>}]} {
    %c0 = arith.constant 0 : index
    %c0_0 = arith.constant 0 : index
    %0 = vector.load %arg1[%c0, %c0_0] : memref<8x784xbf16, #tpu.memory_space<vmem>>, vector<8x784xbf16>
    %c0_1 = arith.constant 0 : index
    %c0_2 = arith.constant 0 : index
    %1 = vector.load %arg2[%c0_1, %c0_2] : memref<784x256xbf16, #tpu.memory_space<vmem>>, vector<784x256xbf16>
    %cst = arith.constant dense<0.000000e+00> : vector<8x256xf32>
    %2 = tpu.matmul %0, %1, %cst {dimension_numbers = #tpu.dot_dimension_numbers<[1], [0], [0], [1], [0, 0, 1, 1], [], []>} : vector<8x784xbf16>, vector<784x256xbf16>, vector<8x256xf32> -> vector<8x256xf32>
    %c0_3 = arith.constant 0 : index
    %c0_4 = arith.constant 0 : index
    %3 = vector.load %arg3[%c0_3, %c0_4] : memref<1x256xf32, #tpu.memory_space<vmem>>, vector<1x256xf32>
    %4 = vector.broadcast %3 : vector<1x256xf32> to vector<8x256xf32>
    %5 = arith.addf %2, %4 : vector<8x256xf32>
    %cst_5 = arith.constant 0.000000e+00 : f32
    %6 = vector.broadcast %cst_5 : f32 to vector<8x256xf32>
    %7 = arith.maximumf %5, %6 : vector<8x256xf32>
    %8 = arith.truncf %7 : vector<8x256xf32> to vector<8x256xbf16>
    %c0_6 = arith.constant 0 : index
    %c0_7 = arith.constant 0 : index
    %9 = vector.load %arg4[%c0_6, %c0_7] : memref<256x256xbf16, #tpu.memory_space<vmem>>, vector<256x256xbf16>
    %cst_8 = arith.constant dense<0.000000e+00> : vector<8x256xf32>
    %10 = tpu.matmul %8, %9, %cst_8 {dimension_numbers = #tpu.dot_dimension_numbers<[1], [0], [0], [1], [0, 0, 1, 1], [], []>} : vector<8x256xbf16>, vector<256x256xbf16>, vector<8x256xf32> -> vector<8x256xf32>
    %c0_9 = arith.constant 0 : index
    %c0_10 = arith.constant 0 : index
    %11 = vector.load %arg5[%c0_9, %c0_10] : memref<1x256xf32, #tpu.memory_space<vmem>>, vector<1x256xf32>
    %12 = vector.broadcast %11 : vector<1x256xf32> to vector<8x256xf32>
    %13 = arith.addf %10, %12 : vector<8x256xf32>
    %cst_11 = arith.constant 0.000000e+00 : f32
    %14 = vector.broadcast %cst_11 : f32 to vector<8x256xf32>
    %15 = arith.maximumf %13, %14 : vector<8x256xf32>
    %16 = arith.truncf %15 : vector<8x256xf32> to vector<8x256xbf16>
    %c0_12 = arith.constant 0 : index
    %c0_13 = arith.constant 0 : index
    %17 = vector.load %arg6[%c0_12, %c0_13] : memref<256x784xbf16, #tpu.memory_space<vmem>>, vector<256x784xbf16>
    %cst_14 = arith.constant dense<0.000000e+00> : vector<8x784xf32>
    %18 = tpu.matmul %16, %17, %cst_14 {dimension_numbers = #tpu.dot_dimension_numbers<[1], [0], [0], [1], [0, 0, 1, 1], [], []>} : vector<8x256xbf16>, vector<256x784xbf16>, vector<8x784xf32> -> vector<8x784xf32>
    %c0_15 = arith.constant 0 : index
    %c0_16 = arith.constant 0 : index
    %19 = vector.load %arg7[%c0_15, %c0_16] : memref<1x784xf32, #tpu.memory_space<vmem>>, vector<1x784xf32>
    %20 = vector.broadcast %19 : vector<1x784xf32> to vector<8x784xf32>
    %21 = arith.addf %18, %20 : vector<8x784xf32>
    %cst_17 = arith.constant 0.000000e+00 : f32
    %22 = vector.broadcast %cst_17 : f32 to vector<8x784xf32>
    %23 = arith.subf %22, %21 : vector<8x784xf32>
    %24 = math.exp %23 : vector<8x784xf32>
    %cst_18 = arith.constant 1.000000e+00 : f32
    %25 = vector.broadcast %cst_18 : f32 to vector<8x784xf32>
    %26 = arith.addf %25, %24 : vector<8x784xf32>
    %27 = tpu.reciprocal %26 {approx = true} : vector<8x784xf32> -> vector<8x784xf32>
    %28 = arith.truncf %27 : vector<8x784xf32> to vector<8x784xbf16>
    %c0_19 = arith.constant 0 : index
    %c0_20 = arith.constant 0 : index
    %29 = vector.load %arg8[%c0_19, %c0_20] : memref<8x784xbf16, #tpu.memory_space<vmem>>, vector<8x784xbf16>
    tpu.vector_store %arg8[%c0_19, %c0_20], %28 {strides = array<i32>} : memref<8x784xbf16, #tpu.memory_space<vmem>>, vector<8x784xbf16>,
    return
  }
  func.func @transform_0(%arg0: i32) -> (i32, i32) {
    %c0_i32 = arith.constant 0 : i32
    %c0_i32_0 = arith.constant 0 : i32
    return %arg0, %c0_i32 : i32, i32
  }
  func.func @transform_1(%arg0: i32) -> (i32, i32) {
    %c0_i32 = arith.constant 0 : i32
    %c0_i32_0 = arith.constant 0 : i32
    %c0_i32_1 = arith.constant 0 : i32
    return %c0_i32, %c0_i32_0 : i32, i32
  }
  func.func @transform_2(%arg0: i32) -> (i32, i32) {
    %c0_i32 = arith.constant 0 : i32
    %c0_i32_0 = arith.constant 0 : i32
    %c0_i32_1 = arith.constant 0 : i32
    return %c0_i32, %c0_i32_0 : i32, i32
  }
  func.func @transform_3(%arg0: i32) -> (i32, i32) {
    %c0_i32 = arith.constant 0 : i32
    %c0_i32_0 = arith.constant 0 : i32
    %c0_i32_1 = arith.constant 0 : i32
    return %c0_i32, %c0_i32_0 : i32, i32
  }
  func.func @transform_4(%arg0: i32) -> (i32, i32) {
    %c0_i32 = arith.constant 0 : i32
    %c0_i32_0 = arith.constant 0 : i32
    %c0_i32_1 = arith.constant 0 : i32
    return %c0_i32, %c0_i32_0 : i32, i32
  }
  func.func @transform_5(%arg0: i32) -> (i32, i32) {
    %c0_i32 = arith.constant 0 : i32
    %c0_i32_0 = arith.constant 0 : i32
    %c0_i32_1 = arith.constant 0 : i32
    return %c0_i32, %c0_i32_0 : i32, i32
  }
  func.func @transform_6(%arg0: i32) -> (i32, i32) {
    %c0_i32 = arith.constant 0 : i32
    %c0_i32_0 = arith.constant 0 : i32
    %c0_i32_1 = arith.constant 0 : i32
    return %c0_i32, %c0_i32_0 : i32, i32
  }
  func.func @transform_7(%arg0: i32) -> (i32, i32) {
    %c0_i32 = arith.constant 0 : i32
    %c0_i32_0 = arith.constant 0 : i32
    return %arg0, %c0_i32 : i32, i32
  }
}

</mosaic_0001>

<llo_original>
// kernel: autoencoder_forward.1
$region0: #{autoencoder_forward.1}
  #allocation0 [shape = 'u32[]', space=smem, size = 0x4, offset = 0x4, fixed_abs, tag = 'smem constant byte address 0x4 - core index']
  #allocation1 [shape = 'u32[72,128]{1,0:T(1,128)}', space=vmem, size = 0x9000, scoped, tag = 'internal scratch']
  %s0 = inlined_call_operand.vmem [shape: bf16[16,784], index: 0, kind: input, shape index: {}]
  %s1 = inlined_call_operand.vmem [shape: bf16[784,256], index: 1, kind: input, shape index: {}]
  %s2 = inlined_call_operand.vmem [shape: f32[1,256], index: 2, kind: input, shape index: {}]
  %s3 = inlined_call_operand.vmem [shape: bf16[256,256], index: 3, kind: input, shape index: {}]
  %s4 = inlined_call_operand.vmem [shape: f32[1,256], index: 4, kind: input, shape index: {}]
  %s5 = inlined_call_operand.vmem [shape: bf16[256,784], index: 5, kind: input, shape index: {}]
  %s6 = inlined_call_operand.vmem [shape: f32[1,784], index: 6, kind: input, shape index: {}]
  %s7 = inlined_call_operand.hbm [shape: bf16[16,784], index: 7, kind: output, shape index: {}]
  %s8 = sld [smem:[#allocation0]]
  $region61: #{autoencoder_forward.1} parent=0
    _
  %s10 = ssub.s32 1, %s8
  %s11 = scalar_select 0, %s10, %s8
  $region1: #{autoencoder_forward.1} parent=0
    #allocation2 [shape = 'u8[28672]{0}', space=vmem, size = 0x7000, scoped, tag = 'output window, operand 0']
    #allocation3 [shape = 's32[2]{0}', space=sflag, size = 0x8, scoped, tag = 'scoped memory for autoencoder_forward.1']
    %12 = vsyncpa [#allocation3], 0
    %s13 = scalar_lea.sflag [#allocation3], 1
    %14 = vsyncpa %s13, 0
    loop: start=0, step=1, limit=4
    $region2: #{autoencoder_forward.1} parent=1 // loop_pre_header
      _
    $region3: #{autoencoder_forward.1} parent=1 // loop_header
      %s16 = sphi 0, %s20
      %p17 = scmp.ge.s32.totalorder %s16, 4
      %s26 = sphi 0, %s28
      %s29 = sphi 0, %s26
      %s30 = sphi 0, %s29
      %s46 = sphi 0, %s30
      %s50 = sphi 0, %s50
      %s52 = sphi 0, %s50
      %s53 = sphi 0, %s52
      %s67 = sphi 0, %s53
      %s71 = sphi 0, %s71
      %s73 = sphi 0, %s71
      %s74 = sphi 0, %s73
      %s88 = sphi 0, %s74
      %s92 = sphi 0, %s92
      %s94 = sphi 0, %s92
      %s95 = sphi 0, %s94
      %s109 = sphi 0, %s95
      %s113 = sphi 0, %s113
      %s115 = sphi 0, %s113
      %s116 = sphi 0, %s115
      %s130 = sphi 0, %s116
      %s134 = sphi 0, %s134
      %s136 = sphi 0, %s134
      %s137 = sphi 0, %s136
      %s151 = sphi 0, %s137
      %s155 = sphi 0, %s155
      %s157 = sphi 0, %s155
      %s158 = sphi 0, %s157
      %s172 = sphi 0, %s158
      %s178 = sphi 0, %s180
      %s181 = sphi 0, %s178
      %s182 = sphi 0, %s181
      %s198 = sphi 0, %s182
    $region4: #{autoencoder_forward.1} parent=1 // loop_header_branch
      %19 = sbr.rel (%p17) target = $region8
    $region5: #{autoencoder_forward.1} parent=1 // loop_body
      %s21 = ssub.s32 %s16, 1
      %s22 = ssub.s32 %s16, 2
      %s23 = sadd.s32 %s16, 1
      %s24 = ssub.s32 %s16, %s23
      %p25 = scmp.eq.s32.totalorder %s24, 0
      %s27 = sadd.s32 %s26, 1
      %s28 = scalar_select %p25, %s26, %s27
      %p31 = pneg %p25
      %p32 = scmp.eq.s32.totalorder %s16, 1
      %p33 = por %p31, %p32
      %p34 = scmp.ne.s32.totalorder %s26, %s29
      %p35 = scmp.eq.s32.totalorder %s16, 0
      %p36 = por %p34, %p35
      %p37 = scmp.ne.s32.totalorder %s26, %s29
      %p38 = scmp.eq.s32.totalorder %s21, 1
      %p39 = por %p37, %p38
      %p40 = scmp.ne.s32.totalorder %s29, %s30
      %p41 = scmp.eq.s32.totalorder %s21, 0
      %p42 = por %p40, %p41
      %p43 = scmp.ne.s32.totalorder %s29, %s30
      %p44 = scmp.eq.s32.totalorder %s22, 1
      %p45 = por %p43, %p44
      %p47 = scmp.ne.s32.totalorder %s30, %s46
      %p48 = scmp.eq.s32.totalorder %s22, 0
      %p49 = por %p47, %p48
      %s51 = sadd.s32 %s50, 1
      %p54 = scmp.eq.s32.totalorder %s16, 1
      %p55 = scmp.ne.s32.totalorder %s50, %s52
      %p56 = scmp.eq.s32.totalorder %s16, 0
      %p57 = por %p55, %p56
      %p58 = scmp.ne.s32.totalorder %s50, %s52
      %p59 = scmp.eq.s32.totalorder %s21, 1
      %p60 = por %p58, %p59
      %p61 = scmp.ne.s32.totalorder %s52, %s53
      %p62 = scmp.eq.s32.totalorder %s21, 0
      %p63 = por %p61, %p62
      %p64 = scmp.ne.s32.totalorder %s52, %s53
      %p65 = scmp.eq.s32.totalorder %s22, 1
      %p66 = por %p64, %p65
      %p68 = scmp.ne.s32.totalorder %s53, %s67
      %p69 = scmp.eq.s32.totalorder %s22, 0
      %p70 = por %p68, %p69
      %s72 = sadd.s32 %s71, 1
      %p75 = scmp.eq.s32.totalorder %s16, 1
      %p76 = scmp.ne.s32.totalorder %s71, %s73
      %p77 = scmp.eq.s32.totalorder %s16, 0
      %p78 = por %p76, %p77
      %p79 = scmp.ne.s32.totalorder %s71, %s73
      %p80 = scmp.eq.s32.totalorder %s21, 1
      %p81 = por %p79, %p80
      %p82 = scmp.ne.s32.totalorder %s73, %s74
      %p83 = scmp.eq.s32.totalorder %s21, 0
      %p84 = por %p82, %p83
      %p85 = scmp.ne.s32.totalorder %s73, %s74
      %p86 = scmp.eq.s32.totalorder %s22, 1
      %p87 = por %p85, %p86
      %p89 = scmp.ne.s32.totalorder %s74, %s88
      %p90 = scmp.eq.s32.totalorder %s22, 0
      %p91 = por %p89, %p90
      %s93 = sadd.s32 %s92, 1
      %p96 = scmp.eq.s32.totalorder %s16, 1
      %p97 = scmp.ne.s32.totalorder %s92, %s94
      %p98 = scmp.eq.s32.totalorder %s16, 0
      %p99 = por %p97, %p98
      %p100 = scmp.ne.s32.totalorder %s92, %s94
      %p101 = scmp.eq.s32.totalorder %s21, 1
      %p102 = por %p100, %p101
      %p103 = scmp.ne.s32.totalorder %s94, %s95
      %p104 = scmp.eq.s32.totalorder %s21, 0
      %p105 = por %p103, %p104
      %p106 = scmp.ne.s32.totalorder %s94, %s95
      %p107 = scmp.eq.s32.totalorder %s22, 1
      %p108 = por %p106, %p107
      %p110 = scmp.ne.s32.totalorder %s95, %s109
      %p111 = scmp.eq.s32.totalorder %s22, 0
      %p112 = por %p110, %p111
      %s114 = sadd.s32 %s113, 1
      %p117 = scmp.eq.s32.totalorder %s16, 1
      %p118 = scmp.ne.s32.totalorder %s113, %s115
      %p119 = scmp.eq.s32.totalorder %s16, 0
      %p120 = por %p118, %p119
      %p121 = scmp.ne.s32.totalorder %s113, %s115
      %p122 = scmp.eq.s32.totalorder %s21, 1
      %p123 = por %p121, %p122
      %p124 = scmp.ne.s32.totalorder %s115, %s116
      %p125 = scmp.eq.s32.totalorder %s21, 0
      %p126 = por %p124, %p125
      %p127 = scmp.ne.s32.totalorder %s115, %s116
      %p128 = scmp.eq.s32.totalorder %s22, 1
      %p129 = por %p127, %p128
      %p131 = scmp.ne.s32.totalorder %s116, %s130
      %p132 = scmp.eq.s32.totalorder %s22, 0
      %p133 = por %p131, %p132
      %s135 = sadd.s32 %s134, 1
      %p138 = scmp.eq.s32.totalorder %s16, 1
      %p139 = scmp.ne.s32.totalorder %s134, %s136
      %p140 = scmp.eq.s32.totalorder %s16, 0
      %p141 = por %p139, %p140
      %p142 = scmp.ne.s32.totalorder %s134, %s136
      %p143 = scmp.eq.s32.totalorder %s21, 1
      %p144 = por %p142, %p143
      %p145 = scmp.ne.s32.totalorder %s136, %s137
      %p146 = scmp.eq.s32.totalorder %s21, 0
      %p147 = por %p145, %p146
      %p148 = scmp.ne.s32.totalorder %s136, %s137
      %p149 = scmp.eq.s32.totalorder %s22, 1
      %p150 = por %p148, %p149
      %p152 = scmp.ne.s32.totalorder %s137, %s151
      %p153 = scmp.eq.s32.totalorder %s22, 0
      %p154 = por %p152, %p153
      %s156 = sadd.s32 %s155, 1
      %p159 = scmp.eq.s32.totalorder %s16, 1
      %p160 = scmp.ne.s32.totalorder %s155, %s157
      %p161 = scmp.eq.s32.totalorder %s16, 0
      %p162 = por %p160, %p161
      %p163 = scmp.ne.s32.totalorder %s155, %s157
      %p164 = scmp.eq.s32.totalorder %s21, 1
      %p165 = por %p163, %p164
      %p166 = scmp.ne.s32.totalorder %s157, %s158
      %p167 = scmp.eq.s32.totalorder %s21, 0
      %p168 = por %p166, %p167
      %p169 = scmp.ne.s32.totalorder %s157, %s158
      %p170 = scmp.eq.s32.totalorder %s22, 1
      %p171 = por %p169, %p170
      %p173 = scmp.ne.s32.totalorder %s158, %s172
      %p174 = scmp.eq.s32.totalorder %s22, 0
      %p175 = por %p173, %p174
      %s176 = ssub.s32 %s16, %s23
      %p177 = scmp.eq.s32.totalorder %s176, 0
      %s179 = sadd.s32 %s178, 1
      %s180 = scalar_select %p177, %s178, %s179
      %p183 = pneg %p177
      %p184 = scmp.eq.s32.totalorder %s16, 1
      %p185 = por %p183, %p184
      %p186 = scmp.ne.s32.totalorder %s178, %s181
      %p187 = scmp.eq.s32.totalorder %s16, 0
      %p188 = por %p186, %p187
      %p189 = scmp.ne.s32.totalorder %s178, %s181
      %p190 = scmp.eq.s32.totalorder %s21, 1
      %p191 = por %p189, %p190
      %p192 = scmp.ne.s32.totalorder %s181, %s182
      %p193 = scmp.eq.s32.totalorder %s21, 0
      %p194 = por %p192, %p193
      %p195 = scmp.ne.s32.totalorder %s181, %s182
      %p196 = scmp.eq.s32.totalorder %s22, 1
      %p197 = por %p195, %p196
      %p199 = scmp.ne.s32.totalorder %s182, %s198
      %p200 = scmp.eq.s32.totalorder %s22, 0
      %p201 = por %p199, %p200
      %p202 = scmp.le.s32.totalorder 1, %s16
      %p203 = scmp.lt.s32.totalorder %s16, 3
      %p204 = pnand %p202, %p203
      %p205 = pneg %p204
      // Predicated region
      $region9: #{autoencoder_forward.1} parent=5 // pred_check
        _
      $region10: #{autoencoder_forward.1} parent=5 // pred_check_branch
        %207 = sbr.rel (%p204) target = $region12
      $region11: #{autoencoder_forward.1} parent=5 // pred_region
        %s208 = ssub.s32 %s16, 1
        // Predicated region
        $region13: #{autoencoder_forward.1} parent=11 // pred_check
          %p209 = pneg %p63
        $region14: #{autoencoder_forward.1} parent=11 // pred_check_branch
          %211 = sbr.rel (%p209) target = $region16
        $region15: #{autoencoder_forward.1} parent=11 // pred_region
          _
        $region16: #{autoencoder_forward.1} parent=11 // pred_fallthru
          _
        // Predicated region
        $region17: #{autoencoder_forward.1} parent=11 // pred_check
          %p212 = pneg %p84
        $region18: #{autoencoder_forward.1} parent=11 // pred_check_branch
          %214 = sbr.rel (%p212) target = $region20
        $region19: #{autoencoder_forward.1} parent=11 // pred_region
          _
        $region20: #{autoencoder_forward.1} parent=11 // pred_fallthru
          _
        // Predicated region
        $region21: #{autoencoder_forward.1} parent=11 // pred_check
          %p215 = pneg %p105
        $region22: #{autoencoder_forward.1} parent=11 // pred_check_branch
          %217 = sbr.rel (%p215) target = $region24
        $region23: #{autoencoder_forward.1} parent=11 // pred_region
          _
        $region24: #{autoencoder_forward.1} parent=11 // pred_fallthru
          _
        // Predicated region
        $region25: #{autoencoder_forward.1} parent=11 // pred_check
          %p218 = pneg %p126
        $region26: #{autoencoder_forward.1} parent=11 // pred_check_branch
          %220 = sbr.rel (%p218) target = $region28
        $region27: #{autoencoder_forward.1} parent=11 // pred_region
          _
        $region28: #{autoencoder_forward.1} parent=11 // pred_fallthru
          _
        // Predicated region
        $region29: #{autoencoder_forward.1} parent=11 // pred_check
          %p221 = pneg %p147
        $region30: #{autoencoder_forward.1} parent=11 // pred_check_branch
          %223 = sbr.rel (%p221) target = $region32
        $region31: #{autoencoder_forward.1} parent=11 // pred_region
          _
        $region32: #{autoencoder_forward.1} parent=11 // pred_fallthru
          _
        // Predicated region
        $region33: #{autoencoder_forward.1} parent=11 // pred_check
          %p224 = pneg %p168
        $region34: #{autoencoder_forward.1} parent=11 // pred_check_branch
          %226 = sbr.rel (%p224) target = $region36
        $region35: #{autoencoder_forward.1} parent=11 // pred_region
          _
        $region36: #{autoencoder_forward.1} parent=11 // pred_fallthru
          _
      $region12: #{autoencoder_forward.1} parent=5 // pred_fallthru
        _
      %p227 = scmp.lt.s32.totalorder %s16, 2
      // Predicated region
      $region37: #{autoencoder_forward.1} parent=5 // pred_check
        %p228 = pneg %p227
      $region38: #{autoencoder_forward.1} parent=5 // pred_check_branch
        %230 = sbr.rel (%p228) target = $region40
      $region39: #{autoencoder_forward.1} parent=5 // pred_region
        // Predicated region
        $region41: #{autoencoder_forward.1} parent=39 // pred_check
          %p231 = pneg %p36
        $region42: #{autoencoder_forward.1} parent=39 // pred_check_branch
          %233 = sbr.rel (%p231) target = $region44
        $region43: #{autoencoder_forward.1} parent=39 // pred_region
          %p234 = scmp.lt.s32.totalorder %s16, 1
          %s235 = scalar_select %p234, %s16, 1
          %s236 = smul.addr %s235, 7
          %s237 = smul.addr %s236, 4
          %s238 = scalar_lea.vmem %s0, %s237
        $region44: #{autoencoder_forward.1} parent=39 // pred_fallthru
          _
      $region40: #{autoencoder_forward.1} parent=5 // pred_fallthru
        _
      %p239 = scmp.le.s32.totalorder 1, %s16
      %p240 = scmp.lt.s32.totalorder %s16, 3
      %p241 = pnand %p239, %p240
      %p242 = pneg %p241
      // Predicated region
      $region45: #{autoencoder_forward.1} parent=5 // pred_check
        _
      $region46: #{autoencoder_forward.1} parent=5 // pred_check_branch
        %244 = sbr.rel (%p241) target = $region48
      $region47: #{autoencoder_forward.1} parent=5 // pred_region
        %s245 = ssub.s32 %s16, 1
        %p246 = scmp.lt.s32.totalorder %s21, 1
        %s247 = scalar_select %p246, %s21, 1
        %s248 = smul.addr %s247, 7
        %s249 = smul.addr %s248, 4
        %s250 = scalar_lea.vmem %s0, %s249
        %p251 = pneg %p42
        %p252 = pneg %p39
        %p253 = pneg %p63
        %p254 = pneg %p60
        %p255 = pneg %p84
        %p256 = pneg %p81
        %p257 = pneg %p105
        %p258 = pneg %p102
        %p259 = pneg %p126
        %p260 = pneg %p123
        %p261 = pneg %p147
        %p262 = pneg %p144
        %p263 = pneg %p168
        %p264 = pneg %p165
        %p265 = pneg %p194
        %p266 = pneg %p191
        %s267 = sand.u32 %s181, 1
        %s268 = scalar_lea.sflag [#allocation3], %s267
        %s269 = sand.u32 %s181, 1
        %s270 = smul.addr %s269, 28
        %s271 = scalar_lea.vmem [#allocation2], %s270
        %p272 = scmp.lt.s32.totalorder %s21, 1
        %s273 = scalar_select %p272, %s21, 1
        %s274 = smul.addr %s273, 7
        %s275 = smul.addr %s274, 4
        %s276 = scalar_lea.vmem %s0, %s275
        %v278 = vld [vmem:[%s276] sm:$0xff]
        %v279 = vld [vmem:[%s276 + $0x8] sm:$0xff]
        %v280 = vld [vmem:[%s276 + $0x10] sm:$0xff]
        %v281 = vld [vmem:[%s276 + $0x18] sm:$0xf]
        %v282 = vld [vmem:[%s1] sm:$0xff]
        %v283 = vld [vmem:[%s1 + $0x8] sm:$0xff]
        %v284 = vld [vmem:[%s1 + $0x10] sm:$0xff]
        %v285 = vld [vmem:[%s1 + $0x18] sm:$0xff]
        %v286 = vld [vmem:[%s1 + $0x20] sm:$0xff]
        %v287 = vld [vmem:[%s1 + $0x28] sm:$0xff]
        %v288 = vld [vmem:[%s1 + $0x30] sm:$0xff]
        %v289 = vld [vmem:[%s1 + $0x38] sm:$0xff]
        %v290 = vld [vmem:[%s1 + $0x40] sm:$0xff]
        %v291 = vld [vmem:[%s1 + $0x48] sm:$0xff]
        %v292 = vld [vmem:[%s1 + $0x50] sm:$0xff]
        %v293 = vld [vmem:[%s1 + $0x58] sm:$0xff]
        %v294 = vld [vmem:[%s1 + $0x60] sm:$0xff]
        %v295 = vld [vmem:[%s1 + $0x68] sm:$0xff]
        %v296 = vld [vmem:[%s1 + $0x70] sm:$0xff]
        %v297 = vld [vmem:[%s1 + $0x78] sm:$0xff]
        %v298 = vld [vmem:[%s1 + $0x80] sm:$0xff]
        %v299 = vld [vmem:[%s1 + $0x88] sm:$0xff]
        %v300 = vld [vmem:[%s1 + $0x90] sm:$0xff]
        %v301 = vld [vmem:[%s1 + $0x98] sm:$0xff]
        %v302 = vld [vmem:[%s1 + $0xa0] sm:$0xff]
        %v303 = vld [vmem:[%s1 + $0xa8] sm:$0xff]
        %v304 = vld [vmem:[%s1 + $0xb0] sm:$0xff]
        %v305 = vld [vmem:[%s1 + $0xb8] sm:$0xff]
        %v306 = vld [vmem:[%s1 + $0xc0] sm:$0xff]
        %v307 = vld [vmem:[%s1 + $0xc8] sm:$0xff]
        %v308 = vld [vmem:[%s1 + $0xd0] sm:$0xff]
        %v309 = vld [vmem:[%s1 + $0xd8] sm:$0xff]
        %v310 = vld [vmem:[%s1 + $0xe0] sm:$0xff]
        %v311 = vld [vmem:[%s1 + $0xe8] sm:$0xff]
        %v312 = vld [vmem:[%s1 + $0xf0] sm:$0xff]
        %v313 = vld [vmem:[%s1 + $0xf8] sm:$0xff]
        %v314 = vld [vmem:[%s1 + $0x100] sm:$0xff]
        %v315 = vld [vmem:[%s1 + $0x108] sm:$0xff]
        %v316 = vld [vmem:[%s1 + $0x110] sm:$0xff]
        %v317 = vld [vmem:[%s1 + $0x118] sm:$0xff]
        %v318 = vld [vmem:[%s1 + $0x120] sm:$0xff]
        %v319 = vld [vmem:[%s1 + $0x128] sm:$0xff]
        %v320 = vld [vmem:[%s1 + $0x130] sm:$0xff]
        %v321 = vld [vmem:[%s1 + $0x138] sm:$0xff]
        %v322 = vld [vmem:[%s1 + $0x140] sm:$0xff]
        %v323 = vld [vmem:[%s1 + $0x148] sm:$0xff]
        %v324 = vld [vmem:[%s1 + $0x150] sm:$0xff]
        %v325 = vld [vmem:[%s1 + $0x158] sm:$0xff]
        %v326 = vld [vmem:[%s1 + $0x160] sm:$0xff]
        %v327 = vld [vmem:[%s1 + $0x168] sm:$0xff]
        %v328 = vld [vmem:[%s1 + $0x170] sm:$0xff]
        %v329 = vld [vmem:[%s1 + $0x178] sm:$0xff]
        %v330 = vld [vmem:[%s1 + $0x180] sm:$0xff]
        %v331 = vld [vmem:[%s1 + $0x188] sm:$0xff]
        %v332 = vld [vmem:[%s1 + $0x190] sm:$0xff]
        %v333 = vld [vmem:[%s1 + $0x198] sm:$0xff]
        %v334 = vld [vmem:[%s1 + $0x1a0] sm:$0xff]
        %v335 = vld [vmem:[%s1 + $0x1a8] sm:$0xff]
        %v336 = vld [vmem:[%s1 + $0x1b0] sm:$0xff]
        %v337 = vld [vmem:[%s1 + $0x1b8] sm:$0xff]
        %v338 = vld [vmem:[%s1 + $0x1c0] sm:$0xff]
        %v339 = vld [vmem:[%s1 + $0x1c8] sm:$0xff]
        %v340 = vld [vmem:[%s1 + $0x1d0] sm:$0xff]
        %v341 = vld [vmem:[%s1 + $0x1d8] sm:$0xff]
        %v342 = vld [vmem:[%s1 + $0x1e0] sm:$0xff]
        %v343 = vld [vmem:[%s1 + $0x1e8] sm:$0xff]
        %v344 = vld [vmem:[%s1 + $0x1f0] sm:$0xff]
        %v345 = vld [vmem:[%s1 + $0x1f8] sm:$0xff]
        %v346 = vld [vmem:[%s1 + $0x200] sm:$0xff]
        %v347 = vld [vmem:[%s1 + $0x208] sm:$0xff]
        %v348 = vld [vmem:[%s1 + $0x210] sm:$0xff]
        %v349 = vld [vmem:[%s1 + $0x218] sm:$0xff]
        %v350 = vld [vmem:[%s1 + $0x220] sm:$0xff]
        %v351 = vld [vmem:[%s1 + $0x228] sm:$0xff]
        %v352 = vld [vmem:[%s1 + $0x230] sm:$0xff]
        %v353 = vld [vmem:[%s1 + $0x238] sm:$0xff]
        %v354 = vld [vmem:[%s1 + $0x240] sm:$0xff]
        %v355 = vld [vmem:[%s1 + $0x248] sm:$0xff]
        %v356 = vld [vmem:[%s1 + $0x250] sm:$0xff]
        %v357 = vld [vmem:[%s1 + $0x258] sm:$0xff]
        %v358 = vld [vmem:[%s1 + $0x260] sm:$0xff]
        %v359 = vld [vmem:[%s1 + $0x268] sm:$0xff]
        %v360 = vld [vmem:[%s1 + $0x270] sm:$0xff]
        %v361 = vld [vmem:[%s1 + $0x278] sm:$0xff]
        %v362 = vld [vmem:[%s1 + $0x280] sm:$0xff]
        %v363 = vld [vmem:[%s1 + $0x288] sm:$0xff]
        %v364 = vld [vmem:[%s1 + $0x290] sm:$0xff]
        %v365 = vld [vmem:[%s1 + $0x298] sm:$0xff]
        %v366 = vld [vmem:[%s1 + $0x2a0] sm:$0xff]
        %v367 = vld [vmem:[%s1 + $0x2a8] sm:$0xff]
        %v368 = vld [vmem:[%s1 + $0x2b0] sm:$0xff]
        %v369 = vld [vmem:[%s1 + $0x2b8] sm:$0xff]
        %v370 = vld [vmem:[%s1 + $0x2c0] sm:$0xff]
        %v371 = vld [vmem:[%s1 + $0x2c8] sm:$0xff]
        %v372 = vld [vmem:[%s1 + $0x2d0] sm:$0xff]
        %v373 = vld [vmem:[%s1 + $0x2d8] sm:$0xff]
        %v374 = vld [vmem:[%s1 + $0x2e0] sm:$0xff]
        %v375 = vld [vmem:[%s1 + $0x2e8] sm:$0xff]
        %v376 = vld [vmem:[%s1 + $0x2f0] sm:$0xff]
        %v377 = vld [vmem:[%s1 + $0x2f8] sm:$0xff]
        %v378 = vld [vmem:[%s1 + $0x300] sm:$0xff]
        %v379 = vld [vmem:[%s1 + $0x308] sm:$0xff]
        %v380 = vld [vmem:[%s2] sm:$0x3]
        %v382 = vperm.slane %v380, 0
        %v383 = vperm.slane %v380, 1
        %v390 = vunpack.c.l.b16 %v278
        %v391 = vunpack.c.h.b16 %v278
        %v392 = vunpack.c.l.b16 %v279
        %v393 = vunpack.c.h.b16 %v279
        %v394 = vunpack.c.l.b16 %v280
        %v395 = vunpack.c.h.b16 %v280
        %v396 = vunpack.c.l.b16 %v281
        %v397 = vpack.c.b16 %v390, %v390
        %v398 = vpack.c.b16 %v391, %v391
        %v399 = vpack.c.b16 %v392, %v392
        %v400 = vpack.c.b16 %v393, %v393
        %v401 = vpack.c.b16 %v394, %v394
        %v402 = vpack.c.b16 %v395, %v395
        %v403 = vpack.c.b16 %v396, %v396
        %v508 = vunpack.c.l.b16 %v282
        %v509 = vunpack.c.h.b16 %v282
        %v510 = vunpack.c.l.b16 %v283
        %v511 = vunpack.c.h.b16 %v283
        %v512 = vunpack.c.l.b16 %v284
        %v513 = vunpack.c.h.b16 %v284
        %v514 = vunpack.c.l.b16 %v285
        %v515 = vunpack.c.h.b16 %v285
        %v516 = vunpack.c.l.b16 %v286
        %v517 = vunpack.c.h.b16 %v286
        %v518 = vunpack.c.l.b16 %v287
        %v519 = vunpack.c.h.b16 %v287
        %v520 = vunpack.c.l.b16 %v288
        %v521 = vunpack.c.h.b16 %v288
        %v522 = vunpack.c.l.b16 %v289
        %v523 = vunpack.c.h.b16 %v289
        %v524 = vunpack.c.l.b16 %v290
        %v525 = vunpack.c.h.b16 %v290
        %v526 = vunpack.c.l.b16 %v291
        %v527 = vunpack.c.h.b16 %v291
        %v528 = vunpack.c.l.b16 %v292
        %v529 = vunpack.c.h.b16 %v292
        %v530 = vunpack.c.l.b16 %v293
        %v531 = vunpack.c.h.b16 %v293
        %v532 = vunpack.c.l.b16 %v294
        %v533 = vunpack.c.h.b16 %v294
        %v534 = vunpack.c.l.b16 %v295
        %v535 = vunpack.c.h.b16 %v295
        %v536 = vunpack.c.l.b16 %v296
        %v537 = vunpack.c.h.b16 %v296
        %v538 = vunpack.c.l.b16 %v297
        %v539 = vunpack.c.h.b16 %v297
        %v540 = vunpack.c.l.b16 %v298
        %v541 = vunpack.c.h.b16 %v298
        %v542 = vunpack.c.l.b16 %v299
        %v543 = vunpack.c.h.b16 %v299
        %v544 = vunpack.c.l.b16 %v300
        %v545 = vunpack.c.h.b16 %v300
        %v546 = vunpack.c.l.b16 %v301
        %v547 = vunpack.c.h.b16 %v301
        %v548 = vunpack.c.l.b16 %v302
        %v549 = vunpack.c.h.b16 %v302
        %v550 = vunpack.c.l.b16 %v303
        %v551 = vunpack.c.h.b16 %v303
        %v552 = vunpack.c.l.b16 %v304
        %v553 = vunpack.c.h.b16 %v304
        %v554 = vunpack.c.l.b16 %v305
        %v555 = vunpack.c.h.b16 %v305
        %v556 = vunpack.c.l.b16 %v306
        %v557 = vunpack.c.h.b16 %v306
        %v558 = vunpack.c.l.b16 %v307
        %v559 = vunpack.c.h.b16 %v307
        %v560 = vunpack.c.l.b16 %v308
        %v561 = vunpack.c.h.b16 %v308
        %v562 = vunpack.c.l.b16 %v309
        %v563 = vunpack.c.h.b16 %v309
        %v564 = vunpack.c.l.b16 %v310
        %v565 = vunpack.c.h.b16 %v310
        %v566 = vunpack.c.l.b16 %v311
        %v567 = vunpack.c.h.b16 %v311
        %v568 = vunpack.c.l.b16 %v312
        %v569 = vunpack.c.h.b16 %v312
        %v570 = vunpack.c.l.b16 %v313
        %v571 = vunpack.c.h.b16 %v313
        %v572 = vunpack.c.l.b16 %v314
        %v573 = vunpack.c.h.b16 %v314
        %v574 = vunpack.c.l.b16 %v315
        %v575 = vunpack.c.h.b16 %v315
        %v576 = vunpack.c.l.b16 %v316
        %v577 = vunpack.c.h.b16 %v316
        %v578 = vunpack.c.l.b16 %v317
        %v579 = vunpack.c.h.b16 %v317
        %v580 = vunpack.c.l.b16 %v318
        %v581 = vunpack.c.h.b16 %v318
        %v582 = vunpack.c.l.b16 %v319
        %v583 = vunpack.c.h.b16 %v319
        %v584 = vunpack.c.l.b16 %v320
        %v585 = vunpack.c.h.b16 %v320
        %v586 = vunpack.c.l.b16 %v321
        %v587 = vunpack.c.h.b16 %v321
        %v588 = vunpack.c.l.b16 %v322
        %v589 = vunpack.c.h.b16 %v322
        %v590 = vunpack.c.l.b16 %v323
        %v591 = vunpack.c.h.b16 %v323
        %v592 = vunpack.c.l.b16 %v324
        %v593 = vunpack.c.h.b16 %v324
        %v594 = vunpack.c.l.b16 %v325
        %v595 = vunpack.c.h.b16 %v325
        %v596 = vunpack.c.l.b16 %v326
        %v597 = vunpack.c.h.b16 %v326
        %v598 = vunpack.c.l.b16 %v327
        %v599 = vunpack.c.h.b16 %v327
        %v600 = vunpack.c.l.b16 %v328
        %v601 = vunpack.c.h.b16 %v328
        %v602 = vunpack.c.l.b16 %v329
        %v603 = vunpack.c.h.b16 %v329
        %v604 = vunpack.c.l.b16 %v330
        %v605 = vunpack.c.h.b16 %v330
        %v606 = vunpack.c.l.b16 %v331
        %v607 = vunpack.c.h.b16 %v331
        %v608 = vunpack.c.l.b16 %v332
        %v609 = vunpack.c.h.b16 %v332
        %v610 = vunpack.c.l.b16 %v333
        %v611 = vunpack.c.h.b16 %v333
        %v612 = vunpack.c.l.b16 %v334
        %v613 = vunpack.c.h.b16 %v334
        %v614 = vunpack.c.l.b16 %v335
        %v615 = vunpack.c.h.b16 %v335
        %v616 = vunpack.c.l.b16 %v336
        %v617 = vunpack.c.h.b16 %v336
        %v618 = vunpack.c.l.b16 %v337
        %v619 = vunpack.c.h.b16 %v337
        %v620 = vunpack.c.l.b16 %v338
        %v621 = vunpack.c.h.b16 %v338
        %v622 = vunpack.c.l.b16 %v339
        %v623 = vunpack.c.h.b16 %v339
        %v624 = vunpack.c.l.b16 %v340
        %v625 = vunpack.c.h.b16 %v340
        %v626 = vunpack.c.l.b16 %v341
        %v627 = vunpack.c.h.b16 %v341
        %v628 = vunpack.c.l.b16 %v342
        %v629 = vunpack.c.h.b16 %v342
        %v630 = vunpack.c.l.b16 %v343
        %v631 = vunpack.c.h.b16 %v343
        %v632 = vunpack.c.l.b16 %v344
        %v633 = vunpack.c.h.b16 %v344
        %v634 = vunpack.c.l.b16 %v345
        %v635 = vunpack.c.h.b16 %v345
        %v636 = vunpack.c.l.b16 %v346
        %v637 = vunpack.c.h.b16 %v346
        %v638 = vunpack.c.l.b16 %v347
        %v639 = vunpack.c.h.b16 %v347
        %v640 = vunpack.c.l.b16 %v348
        %v641 = vunpack.c.h.b16 %v348
        %v642 = vunpack.c.l.b16 %v349
        %v643 = vunpack.c.h.b16 %v349
        %v644 = vunpack.c.l.b16 %v350
        %v645 = vunpack.c.h.b16 %v350
        %v646 = vunpack.c.l.b16 %v351
        %v647 = vunpack.c.h.b16 %v351
        %v648 = vunpack.c.l.b16 %v352
        %v649 = vunpack.c.h.b16 %v352
        %v650 = vunpack.c.l.b16 %v353
        %v651 = vunpack.c.h.b16 %v353
        %v652 = vunpack.c.l.b16 %v354
        %v653 = vunpack.c.h.b16 %v354
        %v654 = vunpack.c.l.b16 %v355
        %v655 = vunpack.c.h.b16 %v355
        %v656 = vunpack.c.l.b16 %v356
        %v657 = vunpack.c.h.b16 %v356
        %v658 = vunpack.c.l.b16 %v357
        %v659 = vunpack.c.h.b16 %v357
        %v660 = vunpack.c.l.b16 %v358
        %v661 = vunpack.c.h.b16 %v358
        %v662 = vunpack.c.l.b16 %v359
        %v663 = vunpack.c.h.b16 %v359
        %v664 = vunpack.c.l.b16 %v360
        %v665 = vunpack.c.h.b16 %v360
        %v666 = vunpack.c.l.b16 %v361
        %v667 = vunpack.c.h.b16 %v361
        %v668 = vunpack.c.l.b16 %v362
        %v669 = vunpack.c.h.b16 %v362
        %v670 = vunpack.c.l.b16 %v363
        %v671 = vunpack.c.h.b16 %v363
        %v672 = vunpack.c.l.b16 %v364
        %v673 = vunpack.c.h.b16 %v364
        %v674 = vunpack.c.l.b16 %v365
        %v675 = vunpack.c.h.b16 %v365
        %v676 = vunpack.c.l.b16 %v366
        %v677 = vunpack.c.h.b16 %v366
        %v678 = vunpack.c.l.b16 %v367
        %v679 = vunpack.c.h.b16 %v367
        %v680 = vunpack.c.l.b16 %v368
        %v681 = vunpack.c.h.b16 %v368
        %v682 = vunpack.c.l.b16 %v369
        %v683 = vunpack.c.h.b16 %v369
        %v684 = vunpack.c.l.b16 %v370
        %v685 = vunpack.c.h.b16 %v370
        %v686 = vunpack.c.l.b16 %v371
        %v687 = vunpack.c.h.b16 %v371
        %v688 = vunpack.c.l.b16 %v372
        %v689 = vunpack.c.h.b16 %v372
        %v690 = vunpack.c.l.b16 %v373
        %v691 = vunpack.c.h.b16 %v373
        %v692 = vunpack.c.l.b16 %v374
        %v693 = vunpack.c.h.b16 %v374
        %v694 = vunpack.c.l.b16 %v375
        %v695 = vunpack.c.h.b16 %v375
        %v696 = vunpack.c.l.b16 %v376
        %v697 = vunpack.c.h.b16 %v376
        %v698 = vunpack.c.l.b16 %v377
        %v699 = vunpack.c.h.b16 %v377
        %v700 = vunpack.c.l.b16 %v378
        %v701 = vunpack.c.h.b16 %v378
        %v702 = vunpack.c.l.b16 %v379
        %v703 = vunpack.c.h.b16 %v379
        %v704 = vpack.c.b16 %v510, %v508
        %v705 = vpack.c.b16 %v511, %v509
        %v706 = vpack.c.b16 %v514, %v512
        %v707 = vpack.c.b16 %v515, %v513
        %v708 = vpack.c.b16 %v518, %v516
        %v709 = vpack.c.b16 %v519, %v517
        %v710 = vpack.c.b16 %v522, %v520
        %v711 = vpack.c.b16 %v523, %v521
        %v712 = vpack.c.b16 %v526, %v524
        %v713 = vpack.c.b16 %v527, %v525
        %v714 = vpack.c.b16 %v530, %v528
        %v715 = vpack.c.b16 %v531, %v529
        %v716 = vpack.c.b16 %v534, %v532
        %v717 = vpack.c.b16 %v535, %v533
        %v718 = vpack.c.b16 %v538, %v536
        %v719 = vpack.c.b16 %v539, %v537
        %v720 = vpack.c.b16 %v542, %v540
        %v721 = vpack.c.b16 %v543, %v541
        %v722 = vpack.c.b16 %v546, %v544
        %v723 = vpack.c.b16 %v547, %v545
        %v724 = vpack.c.b16 %v550, %v548
        %v725 = vpack.c.b16 %v551, %v549
        %v726 = vpack.c.b16 %v554, %v552
        %v727 = vpack.c.b16 %v555, %v553
        %v728 = vpack.c.b16 %v558, %v556
        %v729 = vpack.c.b16 %v559, %v557
        %v730 = vpack.c.b16 %v562, %v560
        %v731 = vpack.c.b16 %v563, %v561
        %v732 = vpack.c.b16 %v566, %v564
        %v733 = vpack.c.b16 %v567, %v565
        %v734 = vpack.c.b16 %v570, %v568
        %v735 = vpack.c.b16 %v571, %v569
        %v736 = vpack.c.b16 %v574, %v572
        %v737 = vpack.c.b16 %v575, %v573
        %v738 = vpack.c.b16 %v578, %v576
        %v739 = vpack.c.b16 %v579, %v577
        %v740 = vpack.c.b16 %v582, %v580
        %v741 = vpack.c.b16 %v583, %v581
        %v742 = vpack.c.b16 %v586, %v584
        %v743 = vpack.c.b16 %v587, %v585
        %v744 = vpack.c.b16 %v590, %v588
        %v745 = vpack.c.b16 %v591, %v589
        %v746 = vpack.c.b16 %v594, %v592
        %v747 = vpack.c.b16 %v595, %v593
        %v748 = vpack.c.b16 %v598, %v596
        %v749 = vpack.c.b16 %v599, %v597
        %v750 = vpack.c.b16 %v602, %v600
        %v751 = vpack.c.b16 %v603, %v601
        %v752 = vpack.c.b16 %v606, %v604
        %v753 = vpack.c.b16 %v607, %v605
        %v754 = vpack.c.b16 %v610, %v608
        %v755 = vpack.c.b16 %v611, %v609
        %v756 = vpack.c.b16 %v614, %v612
        %v757 = vpack.c.b16 %v615, %v613
        %v758 = vpack.c.b16 %v618, %v616
        %v759 = vpack.c.b16 %v619, %v617
        %v760 = vpack.c.b16 %v622, %v620
        %v761 = vpack.c.b16 %v623, %v621
        %v762 = vpack.c.b16 %v626, %v624
        %v763 = vpack.c.b16 %v627, %v625
        %v764 = vpack.c.b16 %v630, %v628
        %v765 = vpack.c.b16 %v631, %v629
        %v766 = vpack.c.b16 %v634, %v632
        %v767 = vpack.c.b16 %v635, %v633
        %v768 = vpack.c.b16 %v638, %v636
        %v769 = vpack.c.b16 %v639, %v637
        %v770 = vpack.c.b16 %v642, %v640
        %v771 = vpack.c.b16 %v643, %v641
        %v772 = vpack.c.b16 %v646, %v644
        %v773 = vpack.c.b16 %v647, %v645
        %v774 = vpack.c.b16 %v650, %v648
        %v775 = vpack.c.b16 %v651, %v649
        %v776 = vpack.c.b16 %v654, %v652
        %v777 = vpack.c.b16 %v655, %v653
        %v778 = vpack.c.b16 %v658, %v656
        %v779 = vpack.c.b16 %v659, %v657
        %v780 = vpack.c.b16 %v662, %v660
        %v781 = vpack.c.b16 %v663, %v661
        %v782 = vpack.c.b16 %v666, %v664
        %v783 = vpack.c.b16 %v667, %v665
        %v784 = vpack.c.b16 %v670, %v668
        %v785 = vpack.c.b16 %v671, %v669
        %v786 = vpack.c.b16 %v674, %v672
        %v787 = vpack.c.b16 %v675, %v673
        %v788 = vpack.c.b16 %v678, %v676
        %v789 = vpack.c.b16 %v679, %v677
        %v790 = vpack.c.b16 %v682, %v680
        %v791 = vpack.c.b16 %v683, %v681
        %v792 = vpack.c.b16 %v686, %v684
        %v793 = vpack.c.b16 %v687, %v685
        %v794 = vpack.c.b16 %v690, %v688
        %v795 = vpack.c.b16 %v691, %v689
        %v796 = vpack.c.b16 %v694, %v692
        %v797 = vpack.c.b16 %v695, %v693
        %v798 = vpack.c.b16 %v698, %v696
        %v799 = vpack.c.b16 %v699, %v697
        %v800 = vpack.c.b16 %v702, %v700
        %v801 = vpack.c.b16 %v703, %v701
        %vm900 = vcmask 130048
        %v902 = vsel %vm900, %v403, 0
        %904 = vmatpush.bf16.msra.mxu0 %v718
        %905 = vmatpush.bf16.msra.mxu0 %v716
        %906 = vmatpush.bf16.msra.mxu0 %v714
        %907 = vmatpush.bf16.msra.mxu0 %v712
        %908 = vmatpush.bf16.msra.mxu0 %v710
        %909 = vmatpush.bf16.msra.mxu0 %v708
        %910 = vmatpush.bf16.msra.mxu0 %v706
        %911 = vmatpush.bf16.msra.mxu0 %v704
        %912 = vmatmul.bf16.gmra.mxu0 %v397
        %v913 = vpop.f32.mrf.mxu0
        %v914 = vadd.f32 %v382, %v913
        %v915 = vpop.f32.mrf.mxu0
        %916 = vdwg.mxu0
        %917 = vmatpush.bf16.msra.mxu0 %v734
        %918 = vmatpush.bf16.msra.mxu0 %v732
        %919 = vmatpush.bf16.msra.mxu0 %v730
        %920 = vmatpush.bf16.msra.mxu0 %v728
        %921 = vmatpush.bf16.msra.mxu0 %v726
        %922 = vmatpush.bf16.msra.mxu0 %v724
        %923 = vmatpush.bf16.msra.mxu0 %v722
        %924 = vmatpush.bf16.msra.mxu0 %v720
        %925 = vmatmul.bf16.gmra.mxu0 %v398
        %v926 = vpop.f32.mrf.mxu0
        %v927 = vadd.f32 %v914, %v926
        %v928 = vpop.f32.mrf.mxu0
        %929 = vdwg.mxu0
        %930 = vmatpush.bf16.msra.mxu0 %v750
        %931 = vmatpush.bf16.msra.mxu0 %v748
        %932 = vmatpush.bf16.msra.mxu0 %v746
        %933 = vmatpush.bf16.msra.mxu0 %v744
        %934 = vmatpush.bf16.msra.mxu0 %v742
        %935 = vmatpush.bf16.msra.mxu0 %v740
        %936 = vmatpush.bf16.msra.mxu0 %v738
        %937 = vmatpush.bf16.msra.mxu0 %v736
        %938 = vmatmul.bf16.gmra.mxu0 %v399
        %v939 = vpop.f32.mrf.mxu0
        %v940 = vadd.f32 %v927, %v939
        %v941 = vpop.f32.mrf.mxu0
        %942 = vdwg.mxu0
        %943 = vmatpush.bf16.msra.mxu0 %v766
        %944 = vmatpush.bf16.msra.mxu0 %v764
        %945 = vmatpush.bf16.msra.mxu0 %v762
        %946 = vmatpush.bf16.msra.mxu0 %v760
        %947 = vmatpush.bf16.msra.mxu0 %v758
        %948 = vmatpush.bf16.msra.mxu0 %v756
        %949 = vmatpush.bf16.msra.mxu0 %v754
        %950 = vmatpush.bf16.msra.mxu0 %v752
        %951 = vmatmul.bf16.gmra.mxu0 %v400
        %v952 = vpop.f32.mrf.mxu0
        %v953 = vadd.f32 %v940, %v952
        %v954 = vpop.f32.mrf.mxu0
        %955 = vdwg.mxu0
        %956 = vmatpush.bf16.msra.mxu0 %v782
        %957 = vmatpush.bf16.msra.mxu0 %v780
        %958 = vmatpush.bf16.msra.mxu0 %v778
        %959 = vmatpush.bf16.msra.mxu0 %v776
        %960 = vmatpush.bf16.msra.mxu0 %v774
        %961 = vmatpush.bf16.msra.mxu0 %v772
        %962 = vmatpush.bf16.msra.mxu0 %v770
        %963 = vmatpush.bf16.msra.mxu0 %v768
        %964 = vmatmul.bf16.gmra.mxu0 %v401
        %v965 = vpop.f32.mrf.mxu0
        %v966 = vadd.f32 %v953, %v965
        %v967 = vpop.f32.mrf.mxu0
        %968 = vdwg.mxu0
        %969 = vmatpush.bf16.msra.mxu0 %v798
        %970 = vmatpush.bf16.msra.mxu0 %v796
        %971 = vmatpush.bf16.msra.mxu0 %v794
        %972 = vmatpush.bf16.msra.mxu0 %v792
        %973 = vmatpush.bf16.msra.mxu0 %v790
        %974 = vmatpush.bf16.msra.mxu0 %v788
        %975 = vmatpush.bf16.msra.mxu0 %v786
        %976 = vmatpush.bf16.msra.mxu0 %v784
        %977 = vmatmul.bf16.gmra.mxu0 %v402
        %v978 = vpop.f32.mrf.mxu0
        %v979 = vadd.f32 %v966, %v978
        %v980 = vpop.f32.mrf.mxu0
        %981 = vdwg.mxu0
        %982 = vmatpush.bf16.msra.mxu0 0
        %983 = vmatpush.bf16.msra.mxu0 0
        %984 = vmatpush.bf16.msra.mxu0 0
        %985 = vmatpush.bf16.msra.mxu0 0
        %986 = vmatpush.bf16.msra.mxu0 0
        %987 = vmatpush.bf16.msra.mxu0 0
        %988 = vmatpush.bf16.msra.mxu0 0
        %989 = vmatpush.bf16.msra.mxu0 %v800
        %990 = vmatmul.bf16.gmra.mxu0 %v902
        %v991 = vpop.f32.mrf.mxu0
        %v992 = vadd.f32 %v979, %v991
        %v993 = vpop.f32.mrf.mxu0
        %994 = vdwg.mxu0
        %995 = vmatpush.bf16.msra.mxu0 %v719
        %996 = vmatpush.bf16.msra.mxu0 %v717
        %997 = vmatpush.bf16.msra.mxu0 %v715
        %998 = vmatpush.bf16.msra.mxu0 %v713
        %999 = vmatpush.bf16.msra.mxu0 %v711
        %1000 = vmatpush.bf16.msra.mxu0 %v709
        %1001 = vmatpush.bf16.msra.mxu0 %v707
        %1002 = vmatpush.bf16.msra.mxu0 %v705
        %1003 = vmatmul.bf16.gmra.mxu0 %v397
        %v1004 = vpop.f32.mrf.mxu0
        %v1005 = vadd.f32 %v383, %v1004
        %v1006 = vpop.f32.mrf.mxu0
        %1007 = vdwg.mxu0
        %1008 = vmatpush.bf16.msra.mxu0 %v735
        %1009 = vmatpush.bf16.msra.mxu0 %v733
        %1010 = vmatpush.bf16.msra.mxu0 %v731
        %1011 = vmatpush.bf16.msra.mxu0 %v729
        %1012 = vmatpush.bf16.msra.mxu0 %v727
        %1013 = vmatpush.bf16.msra.mxu0 %v725
        %1014 = vmatpush.bf16.msra.mxu0 %v723
        %1015 = vmatpush.bf16.msra.mxu0 %v721
        %1016 = vmatmul.bf16.gmra.mxu0 %v398
        %v1017 = vpop.f32.mrf.mxu0
        %v1018 = vadd.f32 %v1005, %v1017
        %v1019 = vpop.f32.mrf.mxu0
        %1020 = vdwg.mxu0
        %1021 = vmatpush.bf16.msra.mxu0 %v751
        %1022 = vmatpush.bf16.msra.mxu0 %v749
        %1023 = vmatpush.bf16.msra.mxu0 %v747
        %1024 = vmatpush.bf16.msra.mxu0 %v745
        %1025 = vmatpush.bf16.msra.mxu0 %v743
        %1026 = vmatpush.bf16.msra.mxu0 %v741
        %1027 = vmatpush.bf16.msra.mxu0 %v739
        %1028 = vmatpush.bf16.msra.mxu0 %v737
        %1029 = vmatmul.bf16.gmra.mxu0 %v399
        %v1030 = vpop.f32.mrf.mxu0
        %v1031 = vadd.f32 %v1018, %v1030
        %v1032 = vpop.f32.mrf.mxu0
        %1033 = vdwg.mxu0
        %1034 = vmatpush.bf16.msra.mxu0 %v767
        %1035 = vmatpush.bf16.msra.mxu0 %v765
        %1036 = vmatpush.bf16.msra.mxu0 %v763
        %1037 = vmatpush.bf16.msra.mxu0 %v761
        %1038 = vmatpush.bf16.msra.mxu0 %v759
        %1039 = vmatpush.bf16.msra.mxu0 %v757
        %1040 = vmatpush.bf16.msra.mxu0 %v755
        %1041 = vmatpush.bf16.msra.mxu0 %v753
        %1042 = vmatmul.bf16.gmra.mxu0 %v400
        %v1043 = vpop.f32.mrf.mxu0
        %v1044 = vadd.f32 %v1031, %v1043
        %v1045 = vpop.f32.mrf.mxu0
        %1046 = vdwg.mxu0
        %1047 = vmatpush.bf16.msra.mxu0 %v783
        %1048 = vmatpush.bf16.msra.mxu0 %v781
        %1049 = vmatpush.bf16.msra.mxu0 %v779
        %1050 = vmatpush.bf16.msra.mxu0 %v777
        %1051 = vmatpush.bf16.msra.mxu0 %v775
        %1052 = vmatpush.bf16.msra.mxu0 %v773
        %1053 = vmatpush.bf16.msra.mxu0 %v771
        %1054 = vmatpush.bf16.msra.mxu0 %v769
        %1055 = vmatmul.bf16.gmra.mxu0 %v401
        %v1056 = vpop.f32.mrf.mxu0
        %v1057 = vadd.f32 %v1044, %v1056
        %v1058 = vpop.f32.mrf.mxu0
        %1059 = vdwg.mxu0
        %1060 = vmatpush.bf16.msra.mxu0 %v799
        %1061 = vmatpush.bf16.msra.mxu0 %v797
        %1062 = vmatpush.bf16.msra.mxu0 %v795
        %1063 = vmatpush.bf16.msra.mxu0 %v793
        %1064 = vmatpush.bf16.msra.mxu0 %v791
        %1065 = vmatpush.bf16.msra.mxu0 %v789
        %1066 = vmatpush.bf16.msra.mxu0 %v787
        %1067 = vmatpush.bf16.msra.mxu0 %v785
        %1068 = vmatmul.bf16.gmra.mxu0 %v402
        %v1069 = vpop.f32.mrf.mxu0
        %v1070 = vadd.f32 %v1057, %v1069
        %v1071 = vpop.f32.mrf.mxu0
        %1072 = vdwg.mxu0
        %1073 = vmatpush.bf16.msra.mxu0 0
        %1074 = vmatpush.bf16.msra.mxu0 0
        %1075 = vmatpush.bf16.msra.mxu0 0
        %1076 = vmatpush.bf16.msra.mxu0 0
        %1077 = vmatpush.bf16.msra.mxu0 0
        %1078 = vmatpush.bf16.msra.mxu0 0
        %1079 = vmatpush.bf16.msra.mxu0 0
        %1080 = vmatpush.bf16.msra.mxu0 %v801
        %1081 = vmatmul.bf16.gmra.mxu0 %v902
        %v1082 = vpop.f32.mrf.mxu0
        %v1083 = vadd.f32 %v1070, %v1082
        %v1084 = vpop.f32.mrf.mxu0
        %1085 = vdwg.mxu0
        %v1086 = vmax.f32 %v992, 0.0
        %v1087 = vmax.f32 %v1083, 0.0
        %v1088 = vpack.c.bf16 %v1086, %v1086
        %v1089 = vpack.c.bf16 %v1087, %v1087
        %v1090 = vld [vmem:[%s3] sm:$0xff]
        %v1091 = vld [vmem:[%s3 + $0x8] sm:$0xff]
        %v1092 = vld [vmem:[%s3 + $0x10] sm:$0xff]
        %v1093 = vld [vmem:[%s3 + $0x18] sm:$0xff]
        %v1094 = vld [vmem:[%s3 + $0x20] sm:$0xff]
        %v1095 = vld [vmem:[%s3 + $0x28] sm:$0xff]
        %v1096 = vld [vmem:[%s3 + $0x30] sm:$0xff]
        %v1097 = vld [vmem:[%s3 + $0x38] sm:$0xff]
        %v1098 = vld [vmem:[%s3 + $0x40] sm:$0xff]
        %v1099 = vld [vmem:[%s3 + $0x48] sm:$0xff]
        %v1100 = vld [vmem:[%s3 + $0x50] sm:$0xff]
        %v1101 = vld [vmem:[%s3 + $0x58] sm:$0xff]
        %v1102 = vld [vmem:[%s3 + $0x60] sm:$0xff]
        %v1103 = vld [vmem:[%s3 + $0x68] sm:$0xff]
        %v1104 = vld [vmem:[%s3 + $0x70] sm:$0xff]
        %v1105 = vld [vmem:[%s3 + $0x78] sm:$0xff]
        %v1106 = vld [vmem:[%s3 + $0x80] sm:$0xff]
        %v1107 = vld [vmem:[%s3 + $0x88] sm:$0xff]
        %v1108 = vld [vmem:[%s3 + $0x90] sm:$0xff]
        %v1109 = vld [vmem:[%s3 + $0x98] sm:$0xff]
        %v1110 = vld [vmem:[%s3 + $0xa0] sm:$0xff]
        %v1111 = vld [vmem:[%s3 + $0xa8] sm:$0xff]
        %v1112 = vld [vmem:[%s3 + $0xb0] sm:$0xff]
        %v1113 = vld [vmem:[%s3 + $0xb8] sm:$0xff]
        %v1114 = vld [vmem:[%s3 + $0xc0] sm:$0xff]
        %v1115 = vld [vmem:[%s3 + $0xc8] sm:$0xff]
        %v1116 = vld [vmem:[%s3 + $0xd0] sm:$0xff]
        %v1117 = vld [vmem:[%s3 + $0xd8] sm:$0xff]
        %v1118 = vld [vmem:[%s3 + $0xe0] sm:$0xff]
        %v1119 = vld [vmem:[%s3 + $0xe8] sm:$0xff]
        %v1120 = vld [vmem:[%s3 + $0xf0] sm:$0xff]
        %v1121 = vld [vmem:[%s3 + $0xf8] sm:$0xff]
        %v1122 = vld [vmem:[%s4] sm:$0x3]
        %v1124 = vperm.slane %v1122, 0
        %v1125 = vperm.slane %v1122, 1
        %v1160 = vunpack.c.l.b16 %v1090
        %v1161 = vunpack.c.h.b16 %v1090
        %v1162 = vunpack.c.l.b16 %v1091
        %v1163 = vunpack.c.h.b16 %v1091
        %v1164 = vunpack.c.l.b16 %v1092
        %v1165 = vunpack.c.h.b16 %v1092
        %v1166 = vunpack.c.l.b16 %v1093
        %v1167 = vunpack.c.h.b16 %v1093
        %v1168 = vunpack.c.l.b16 %v1094
        %v1169 = vunpack.c.h.b16 %v1094
        %v1170 = vunpack.c.l.b16 %v1095
        %v1171 = vunpack.c.h.b16 %v1095
        %v1172 = vunpack.c.l.b16 %v1096
        %v1173 = vunpack.c.h.b16 %v1096
        %v1174 = vunpack.c.l.b16 %v1097
        %v1175 = vunpack.c.h.b16 %v1097
        %v1176 = vunpack.c.l.b16 %v1098
        %v1177 = vunpack.c.h.b16 %v1098
        %v1178 = vunpack.c.l.b16 %v1099
        %v1179 = vunpack.c.h.b16 %v1099
        %v1180 = vunpack.c.l.b16 %v1100
        %v1181 = vunpack.c.h.b16 %v1100
        %v1182 = vunpack.c.l.b16 %v1101
        %v1183 = vunpack.c.h.b16 %v1101
        %v1184 = vunpack.c.l.b16 %v1102
        %v1185 = vunpack.c.h.b16 %v1102
        %v1186 = vunpack.c.l.b16 %v1103
        %v1187 = vunpack.c.h.b16 %v1103
        %v1188 = vunpack.c.l.b16 %v1104
        %v1189 = vunpack.c.h.b16 %v1104
        %v1190 = vunpack.c.l.b16 %v1105
        %v1191 = vunpack.c.h.b16 %v1105
        %v1192 = vunpack.c.l.b16 %v1106
        %v1193 = vunpack.c.h.b16 %v1106
        %v1194 = vunpack.c.l.b16 %v1107
        %v1195 = vunpack.c.h.b16 %v1107
        %v1196 = vunpack.c.l.b16 %v1108
        %v1197 = vunpack.c.h.b16 %v1108
        %v1198 = vunpack.c.l.b16 %v1109
        %v1199 = vunpack.c.h.b16 %v1109
        %v1200 = vunpack.c.l.b16 %v1110
        %v1201 = vunpack.c.h.b16 %v1110
        %v1202 = vunpack.c.l.b16 %v1111
        %v1203 = vunpack.c.h.b16 %v1111
        %v1204 = vunpack.c.l.b16 %v1112
        %v1205 = vunpack.c.h.b16 %v1112
        %v1206 = vunpack.c.l.b16 %v1113
        %v1207 = vunpack.c.h.b16 %v1113
        %v1208 = vunpack.c.l.b16 %v1114
        %v1209 = vunpack.c.h.b16 %v1114
        %v1210 = vunpack.c.l.b16 %v1115
        %v1211 = vunpack.c.h.b16 %v1115
        %v1212 = vunpack.c.l.b16 %v1116
        %v1213 = vunpack.c.h.b16 %v1116
        %v1214 = vunpack.c.l.b16 %v1117
        %v1215 = vunpack.c.h.b16 %v1117
        %v1216 = vunpack.c.l.b16 %v1118
        %v1217 = vunpack.c.h.b16 %v1118
        %v1218 = vunpack.c.l.b16 %v1119
        %v1219 = vunpack.c.h.b16 %v1119
        %v1220 = vunpack.c.l.b16 %v1120
        %v1221 = vunpack.c.h.b16 %v1120
        %v1222 = vunpack.c.l.b16 %v1121
        %v1223 = vunpack.c.h.b16 %v1121
        %v1224 = vpack.c.b16 %v1162, %v1160
        %v1225 = vpack.c.b16 %v1163, %v1161
        %v1226 = vpack.c.b16 %v1166, %v1164
        %v1227 = vpack.c.b16 %v1167, %v1165
        %v1228 = vpack.c.b16 %v1170, %v1168
        %v1229 = vpack.c.b16 %v1171, %v1169
        %v1230 = vpack.c.b16 %v1174, %v1172
        %v1231 = vpack.c.b16 %v1175, %v1173
        %v1232 = vpack.c.b16 %v1178, %v1176
        %v1233 = vpack.c.b16 %v1179, %v1177
        %v1234 = vpack.c.b16 %v1182, %v1180
        %v1235 = vpack.c.b16 %v1183, %v1181
        %v1236 = vpack.c.b16 %v1186, %v1184
        %v1237 = vpack.c.b16 %v1187, %v1185
        %v1238 = vpack.c.b16 %v1190, %v1188
        %v1239 = vpack.c.b16 %v1191, %v1189
        %v1240 = vpack.c.b16 %v1194, %v1192
        %v1241 = vpack.c.b16 %v1195, %v1193
        %v1242 = vpack.c.b16 %v1198, %v1196
        %v1243 = vpack.c.b16 %v1199, %v1197
        %v1244 = vpack.c.b16 %v1202, %v1200
        %v1245 = vpack.c.b16 %v1203, %v1201
        %v1246 = vpack.c.b16 %v1206, %v1204
        %v1247 = vpack.c.b16 %v1207, %v1205
        %v1248 = vpack.c.b16 %v1210, %v1208
        %v1249 = vpack.c.b16 %v1211, %v1209
        %v1250 = vpack.c.b16 %v1214, %v1212
        %v1251 = vpack.c.b16 %v1215, %v1213
        %v1252 = vpack.c.b16 %v1218, %v1216
        %v1253 = vpack.c.b16 %v1219, %v1217
        %v1254 = vpack.c.b16 %v1222, %v1220
        %v1255 = vpack.c.b16 %v1223, %v1221
        %1288 = vmatpush.bf16.msra.mxu0 %v1238
        %1289 = vmatpush.bf16.msra.mxu0 %v1236
        %1290 = vmatpush.bf16.msra.mxu0 %v1234
        %1291 = vmatpush.bf16.msra.mxu0 %v1232
        %1292 = vmatpush.bf16.msra.mxu0 %v1230
        %1293 = vmatpush.bf16.msra.mxu0 %v1228
        %1294 = vmatpush.bf16.msra.mxu0 %v1226
        %1295 = vmatpush.bf16.msra.mxu0 %v1224
        %1296 = vmatmul.bf16.gmra.mxu0 %v1088
        %v1297 = vpop.f32.mrf.mxu0
        %v1298 = vadd.f32 %v1124, %v1297
        %v1299 = vpop.f32.mrf.mxu0
        %1300 = vdwg.mxu0
        %1301 = vmatpush.bf16.msra.mxu0 %v1254
        %1302 = vmatpush.bf16.msra.mxu0 %v1252
        %1303 = vmatpush.bf16.msra.mxu0 %v1250
        %1304 = vmatpush.bf16.msra.mxu0 %v1248
        %1305 = vmatpush.bf16.msra.mxu0 %v1246
        %1306 = vmatpush.bf16.msra.mxu0 %v1244
        %1307 = vmatpush.bf16.msra.mxu0 %v1242
        %1308 = vmatpush.bf16.msra.mxu0 %v1240
        %1309 = vmatmul.bf16.gmra.mxu0 %v1089
        %v1310 = vpop.f32.mrf.mxu0
        %v1311 = vadd.f32 %v1298, %v1310
        %v1312 = vpop.f32.mrf.mxu0
        %1313 = vdwg.mxu0
        %1314 = vmatpush.bf16.msra.mxu0 %v1239
        %1315 = vmatpush.bf16.msra.mxu0 %v1237
        %1316 = vmatpush.bf16.msra.mxu0 %v1235
        %1317 = vmatpush.bf16.msra.mxu0 %v1233
        %1318 = vmatpush.bf16.msra.mxu0 %v1231
        %1319 = vmatpush.bf16.msra.mxu0 %v1229
        %1320 = vmatpush.bf16.msra.mxu0 %v1227
        %1321 = vmatpush.bf16.msra.mxu0 %v1225
        %1322 = vmatmul.bf16.gmra.mxu0 %v1088
        %v1323 = vpop.f32.mrf.mxu0
        %v1324 = vadd.f32 %v1125, %v1323
        %v1325 = vpop.f32.mrf.mxu0
        %1326 = vdwg.mxu0
        %1327 = vmatpush.bf16.msra.mxu0 %v1255
        %1328 = vmatpush.bf16.msra.mxu0 %v1253
        %1329 = vmatpush.bf16.msra.mxu0 %v1251
        %1330 = vmatpush.bf16.msra.mxu0 %v1249
        %1331 = vmatpush.bf16.msra.mxu0 %v1247
        %1332 = vmatpush.bf16.msra.mxu0 %v1245
        %1333 = vmatpush.bf16.msra.mxu0 %v1243
        %1334 = vmatpush.bf16.msra.mxu0 %v1241
        %1335 = vmatmul.bf16.gmra.mxu0 %v1089
        %v1336 = vpop.f32.mrf.mxu0
        %v1337 = vadd.f32 %v1324, %v1336
        %v1338 = vpop.f32.mrf.mxu0
        %1339 = vdwg.mxu0
        %v1340 = vmax.f32 %v1311, 0.0
        %v1341 = vmax.f32 %v1337, 0.0
        %v1342 = vpack.c.bf16 %v1340, %v1340
        %v1343 = vpack.c.bf16 %v1341, %v1341
        %v1344 = vld [vmem:[%s5] sm:$0xff]
        %v1345 = vld [vmem:[%s5 + $0x8] sm:$0xff]
        %v1346 = vld [vmem:[%s5 + $0x10] sm:$0xff]
        %v1347 = vld [vmem:[%s5 + $0x18] sm:$0xf]
        %v1348 = vld [vmem:[%s5 + $0x1c] sm:$0xff]
        %v1349 = vld [vmem:[%s5 + $0x24] sm:$0xff]
        %v1350 = vld [vmem:[%s5 + $0x2c] sm:$0xff]
        %v1351 = vld [vmem:[%s5 + $0x34] sm:$0xf]
        %v1352 = vld [vmem:[%s5 + $0x38] sm:$0xff]
        %v1353 = vld [vmem:[%s5 + $0x40] sm:$0xff]
        %v1354 = vld [vmem:[%s5 + $0x48] sm:$0xff]
        %v1355 = vld [vmem:[%s5 + $0x50] sm:$0xf]
        %v1356 = vld [vmem:[%s5 + $0x54] sm:$0xff]
        %v1357 = vld [vmem:[%s5 + $0x5c] sm:$0xff]
        %v1358 = vld [vmem:[%s5 + $0x64] sm:$0xff]
        %v1359 = vld [vmem:[%s5 + $0x6c] sm:$0xf]
        %v1360 = vld [vmem:[%s5 + $0x70] sm:$0xff]
        %v1361 = vld [vmem:[%s5 + $0x78] sm:$0xff]
        %v1362 = vld [vmem:[%s5 + $0x80] sm:$0xff]
        %v1363 = vld [vmem:[%s5 + $0x88] sm:$0xf]
        %v1364 = vld [vmem:[%s5 + $0x8c] sm:$0xff]
        %v1365 = vld [vmem:[%s5 + $0x94] sm:$0xff]
        %v1366 = vld [vmem:[%s5 + $0x9c] sm:$0xff]
        %v1367 = vld [vmem:[%s5 + $0xa4] sm:$0xf]
        %v1368 = vld [vmem:[%s5 + $0xa8] sm:$0xff]
        %v1369 = vld [vmem:[%s5 + $0xb0] sm:$0xff]
        %v1370 = vld [vmem:[%s5 + $0xb8] sm:$0xff]
        %v1371 = vld [vmem:[%s5 + $0xc0] sm:$0xf]
        %v1372 = vld [vmem:[%s5 + $0xc4] sm:$0xff]
        %v1373 = vld [vmem:[%s5 + $0xcc] sm:$0xff]
        %v1374 = vld [vmem:[%s5 + $0xd4] sm:$0xff]
        %v1375 = vld [vmem:[%s5 + $0xdc] sm:$0xf]
        %v1376 = vld [vmem:[%s5 + $0xe0] sm:$0xff]
        %v1377 = vld [vmem:[%s5 + $0xe8] sm:$0xff]
        %v1378 = vld [vmem:[%s5 + $0xf0] sm:$0xff]
        %v1379 = vld [vmem:[%s5 + $0xf8] sm:$0xf]
        %v1380 = vld [vmem:[%s5 + $0xfc] sm:$0xff]
        %v1381 = vld [vmem:[%s5 + $0x104] sm:$0xff]
        %v1382 = vld [vmem:[%s5 + $0x10c] sm:$0xff]
        %v1383 = vld [vmem:[%s5 + $0x114] sm:$0xf]
        %v1384 = vld [vmem:[%s5 + $0x118] sm:$0xff]
        %v1385 = vld [vmem:[%s5 + $0x120] sm:$0xff]
        %v1386 = vld [vmem:[%s5 + $0x128] sm:$0xff]
        %v1387 = vld [vmem:[%s5 + $0x130] sm:$0xf]
        %v1388 = vld [vmem:[%s5 + $0x134] sm:$0xff]
        %v1389 = vld [vmem:[%s5 + $0x13c] sm:$0xff]
        %v1390 = vld [vmem:[%s5 + $0x144] sm:$0xff]
        %v1391 = vld [vmem:[%s5 + $0x14c] sm:$0xf]
        %v1392 = vld [vmem:[%s5 + $0x150] sm:$0xff]
        %v1393 = vld [vmem:[%s5 + $0x158] sm:$0xff]
        %v1394 = vld [vmem:[%s5 + $0x160] sm:$0xff]
        %v1395 = vld [vmem:[%s5 + $0x168] sm:$0xf]
        %v1396 = vld [vmem:[%s5 + $0x16c] sm:$0xff]
        %v1397 = vld [vmem:[%s5 + $0x174] sm:$0xff]
        %v1398 = vld [vmem:[%s5 + $0x17c] sm:$0xff]
        %v1399 = vld [vmem:[%s5 + $0x184] sm:$0xf]
        %v1400 = vld [vmem:[%s5 + $0x188] sm:$0xff]
        %v1401 = vld [vmem:[%s5 + $0x190] sm:$0xff]
        %v1402 = vld [vmem:[%s5 + $0x198] sm:$0xff]
        %v1403 = vld [vmem:[%s5 + $0x1a0] sm:$0xf]
        %v1404 = vld [vmem:[%s5 + $0x1a4] sm:$0xff]
        %v1405 = vld [vmem:[%s5 + $0x1ac] sm:$0xff]
        %v1406 = vld [vmem:[%s5 + $0x1b4] sm:$0xff]
        %v1407 = vld [vmem:[%s5 + $0x1bc] sm:$0xf]
        %v1408 = vld [vmem:[%s5 + $0x1c0] sm:$0xff]
        %v1409 = vld [vmem:[%s5 + $0x1c8] sm:$0xff]
        %v1410 = vld [vmem:[%s5 + $0x1d0] sm:$0xff]
        %v1411 = vld [vmem:[%s5 + $0x1d8] sm:$0xf]
        %v1412 = vld [vmem:[%s5 + $0x1dc] sm:$0xff]
        %v1413 = vld [vmem:[%s5 + $0x1e4] sm:$0xff]
        %v1414 = vld [vmem:[%s5 + $0x1ec] sm:$0xff]
        %v1415 = vld [vmem:[%s5 + $0x1f4] sm:$0xf]
        %v1416 = vld [vmem:[%s5 + $0x1f8] sm:$0xff]
        %v1417 = vld [vmem:[%s5 + $0x200] sm:$0xff]
        %v1418 = vld [vmem:[%s5 + $0x208] sm:$0xff]
        %v1419 = vld [vmem:[%s5 + $0x210] sm:$0xf]
        %v1420 = vld [vmem:[%s5 + $0x214] sm:$0xff]
        %v1421 = vld [vmem:[%s5 + $0x21c] sm:$0xff]
        %v1422 = vld [vmem:[%s5 + $0x224] sm:$0xff]
        %v1423 = vld [vmem:[%s5 + $0x22c] sm:$0xf]
        %v1424 = vld [vmem:[%s5 + $0x230] sm:$0xff]
        %v1425 = vld [vmem:[%s5 + $0x238] sm:$0xff]
        %v1426 = vld [vmem:[%s5 + $0x240] sm:$0xff]
        %v1427 = vld [vmem:[%s5 + $0x248] sm:$0xf]
        %v1428 = vld [vmem:[%s5 + $0x24c] sm:$0xff]
        %v1429 = vld [vmem:[%s5 + $0x254] sm:$0xff]
        %v1430 = vld [vmem:[%s5 + $0x25c] sm:$0xff]
        %v1431 = vld [vmem:[%s5 + $0x264] sm:$0xf]
        %v1432 = vld [vmem:[%s5 + $0x268] sm:$0xff]
        %v1433 = vld [vmem:[%s5 + $0x270] sm:$0xff]
        %v1434 = vld [vmem:[%s5 + $0x278] sm:$0xff]
        %v1435 = vld [vmem:[%s5 + $0x280] sm:$0xf]
        %v1436 = vld [vmem:[%s5 + $0x284] sm:$0xff]
        %v1437 = vld [vmem:[%s5 + $0x28c] sm:$0xff]
        %v1438 = vld [vmem:[%s5 + $0x294] sm:$0xff]
        %v1439 = vld [vmem:[%s5 + $0x29c] sm:$0xf]
        %v1440 = vld [vmem:[%s5 + $0x2a0] sm:$0xff]
        %v1441 = vld [vmem:[%s5 + $0x2a8] sm:$0xff]
        %v1442 = vld [vmem:[%s5 + $0x2b0] sm:$0xff]
        %v1443 = vld [vmem:[%s5 + $0x2b8] sm:$0xf]
        %v1444 = vld [vmem:[%s5 + $0x2bc] sm:$0xff]
        %v1445 = vld [vmem:[%s5 + $0x2c4] sm:$0xff]
        %v1446 = vld [vmem:[%s5 + $0x2cc] sm:$0xff]
        %v1447 = vld [vmem:[%s5 + $0x2d4] sm:$0xf]
        %v1448 = vld [vmem:[%s5 + $0x2d8] sm:$0xff]
        %v1449 = vld [vmem:[%s5 + $0x2e0] sm:$0xff]
        %v1450 = vld [vmem:[%s5 + $0x2e8] sm:$0xff]
        %v1451 = vld [vmem:[%s5 + $0x2f0] sm:$0xf]
        %v1452 = vld [vmem:[%s5 + $0x2f4] sm:$0xff]
        %v1453 = vld [vmem:[%s5 + $0x2fc] sm:$0xff]
        %v1454 = vld [vmem:[%s5 + $0x304] sm:$0xff]
        %v1455 = vld [vmem:[%s5 + $0x30c] sm:$0xf]
        %v1456 = vld [vmem:[%s5 + $0x310] sm:$0xff]
        %v1457 = vld [vmem:[%s5 + $0x318] sm:$0xff]
        %v1458 = vld [vmem:[%s5 + $0x320] sm:$0xff]
        %v1459 = vld [vmem:[%s5 + $0x328] sm:$0xf]
        %v1460 = vld [vmem:[%s5 + $0x32c] sm:$0xff]
        %v1461 = vld [vmem:[%s5 + $0x334] sm:$0xff]
        %v1462 = vld [vmem:[%s5 + $0x33c] sm:$0xff]
        %v1463 = vld [vmem:[%s5 + $0x344] sm:$0xf]
        %v1464 = vld [vmem:[%s5 + $0x348] sm:$0xff]
        %v1465 = vld [vmem:[%s5 + $0x350] sm:$0xff]
        %v1466 = vld [vmem:[%s5 + $0x358] sm:$0xff]
        %v1467 = vld [vmem:[%s5 + $0x360] sm:$0xf]
        %v1468 = vld [vmem:[%s5 + $0x364] sm:$0xff]
        %v1469 = vld [vmem:[%s5 + $0x36c] sm:$0xff]
        %v1470 = vld [vmem:[%s5 + $0x374] sm:$0xff]
        %v1471 = vld [vmem:[%s5 + $0x37c] sm:$0xf]
        %v1472 = vld [vmem:[%s6] sm:$0x7f]
        %v1474 = vperm.slane %v1472, 0
        %v1475 = vperm.slane %v1472, 1
        %v1476 = vperm.slane %v1472, 2
        %v1477 = vperm.slane %v1472, 3
        %v1478 = vperm.slane %v1472, 4
        %v1479 = vperm.slane %v1472, 5
        %v1480 = vperm.slane %v1472, 6
        %v1616 = vunpack.c.l.b16 %v1344
        %v1617 = vunpack.c.h.b16 %v1344
        %v1618 = vunpack.c.l.b16 %v1345
        %v1619 = vunpack.c.h.b16 %v1345
        %v1620 = vunpack.c.l.b16 %v1346
        %v1621 = vunpack.c.h.b16 %v1346
        %v1622 = vunpack.c.l.b16 %v1347
        %v1623 = vunpack.c.l.b16 %v1348
        %v1624 = vunpack.c.h.b16 %v1348
        %v1625 = vunpack.c.l.b16 %v1349
        %v1626 = vunpack.c.h.b16 %v1349
        %v1627 = vunpack.c.l.b16 %v1350
        %v1628 = vunpack.c.h.b16 %v1350
        %v1629 = vunpack.c.l.b16 %v1351
        %v1630 = vunpack.c.l.b16 %v1352
        %v1631 = vunpack.c.h.b16 %v1352
        %v1632 = vunpack.c.l.b16 %v1353
        %v1633 = vunpack.c.h.b16 %v1353
        %v1634 = vunpack.c.l.b16 %v1354
        %v1635 = vunpack.c.h.b16 %v1354
        %v1636 = vunpack.c.l.b16 %v1355
        %v1637 = vunpack.c.l.b16 %v1356
        %v1638 = vunpack.c.h.b16 %v1356
        %v1639 = vunpack.c.l.b16 %v1357
        %v1640 = vunpack.c.h.b16 %v1357
        %v1641 = vunpack.c.l.b16 %v1358
        %v1642 = vunpack.c.h.b16 %v1358
        %v1643 = vunpack.c.l.b16 %v1359
        %v1644 = vunpack.c.l.b16 %v1360
        %v1645 = vunpack.c.h.b16 %v1360
        %v1646 = vunpack.c.l.b16 %v1361
        %v1647 = vunpack.c.h.b16 %v1361
        %v1648 = vunpack.c.l.b16 %v1362
        %v1649 = vunpack.c.h.b16 %v1362
        %v1650 = vunpack.c.l.b16 %v1363
        %v1651 = vunpack.c.l.b16 %v1364
        %v1652 = vunpack.c.h.b16 %v1364
        %v1653 = vunpack.c.l.b16 %v1365
        %v1654 = vunpack.c.h.b16 %v1365
        %v1655 = vunpack.c.l.b16 %v1366
        %v1656 = vunpack.c.h.b16 %v1366
        %v1657 = vunpack.c.l.b16 %v1367
        %v1658 = vunpack.c.l.b16 %v1368
        %v1659 = vunpack.c.h.b16 %v1368
        %v1660 = vunpack.c.l.b16 %v1369
        %v1661 = vunpack.c.h.b16 %v1369
        %v1662 = vunpack.c.l.b16 %v1370
        %v1663 = vunpack.c.h.b16 %v1370
        %v1664 = vunpack.c.l.b16 %v1371
        %v1665 = vunpack.c.l.b16 %v1372
        %v1666 = vunpack.c.h.b16 %v1372
        %v1667 = vunpack.c.l.b16 %v1373
        %v1668 = vunpack.c.h.b16 %v1373
        %v1669 = vunpack.c.l.b16 %v1374
        %v1670 = vunpack.c.h.b16 %v1374
        %v1671 = vunpack.c.l.b16 %v1375
        %v1672 = vunpack.c.l.b16 %v1376
        %v1673 = vunpack.c.h.b16 %v1376
        %v1674 = vunpack.c.l.b16 %v1377
        %v1675 = vunpack.c.h.b16 %v1377
        %v1676 = vunpack.c.l.b16 %v1378
        %v1677 = vunpack.c.h.b16 %v1378
        %v1678 = vunpack.c.l.b16 %v1379
        %v1679 = vunpack.c.l.b16 %v1380
        %v1680 = vunpack.c.h.b16 %v1380
        %v1681 = vunpack.c.l.b16 %v1381
        %v1682 = vunpack.c.h.b16 %v1381
        %v1683 = vunpack.c.l.b16 %v1382
        %v1684 = vunpack.c.h.b16 %v1382
        %v1685 = vunpack.c.l.b16 %v1383
        %v1686 = vunpack.c.l.b16 %v1384
        %v1687 = vunpack.c.h.b16 %v1384
        %v1688 = vunpack.c.l.b16 %v1385
        %v1689 = vunpack.c.h.b16 %v1385
        %v1690 = vunpack.c.l.b16 %v1386
        %v1691 = vunpack.c.h.b16 %v1386
        %v1692 = vunpack.c.l.b16 %v1387
        %v1693 = vunpack.c.l.b16 %v1388
        %v1694 = vunpack.c.h.b16 %v1388
        %v1695 = vunpack.c.l.b16 %v1389
        %v1696 = vunpack.c.h.b16 %v1389
        %v1697 = vunpack.c.l.b16 %v1390
        %v1698 = vunpack.c.h.b16 %v1390
        %v1699 = vunpack.c.l.b16 %v1391
        %v1700 = vunpack.c.l.b16 %v1392
        %v1701 = vunpack.c.h.b16 %v1392
        %v1702 = vunpack.c.l.b16 %v1393
        %v1703 = vunpack.c.h.b16 %v1393
        %v1704 = vunpack.c.l.b16 %v1394
        %v1705 = vunpack.c.h.b16 %v1394
        %v1706 = vunpack.c.l.b16 %v1395
        %v1707 = vunpack.c.l.b16 %v1396
        %v1708 = vunpack.c.h.b16 %v1396
        %v1709 = vunpack.c.l.b16 %v1397
        %v1710 = vunpack.c.h.b16 %v1397
        %v1711 = vunpack.c.l.b16 %v1398
        %v1712 = vunpack.c.h.b16 %v1398
        %v1713 = vunpack.c.l.b16 %v1399
        %v1714 = vunpack.c.l.b16 %v1400
        %v1715 = vunpack.c.h.b16 %v1400
        %v1716 = vunpack.c.l.b16 %v1401
        %v1717 = vunpack.c.h.b16 %v1401
        %v1718 = vunpack.c.l.b16 %v1402
        %v1719 = vunpack.c.h.b16 %v1402
        %v1720 = vunpack.c.l.b16 %v1403
        %v1721 = vunpack.c.l.b16 %v1404
        %v1722 = vunpack.c.h.b16 %v1404
        %v1723 = vunpack.c.l.b16 %v1405
        %v1724 = vunpack.c.h.b16 %v1405
        %v1725 = vunpack.c.l.b16 %v1406
        %v1726 = vunpack.c.h.b16 %v1406
        %v1727 = vunpack.c.l.b16 %v1407
        %v1728 = vunpack.c.l.b16 %v1408
        %v1729 = vunpack.c.h.b16 %v1408
        %v1730 = vunpack.c.l.b16 %v1409
        %v1731 = vunpack.c.h.b16 %v1409
        %v1732 = vunpack.c.l.b16 %v1410
        %v1733 = vunpack.c.h.b16 %v1410
        %v1734 = vunpack.c.l.b16 %v1411
        %v1735 = vunpack.c.l.b16 %v1412
        %v1736 = vunpack.c.h.b16 %v1412
        %v1737 = vunpack.c.l.b16 %v1413
        %v1738 = vunpack.c.h.b16 %v1413
        %v1739 = vunpack.c.l.b16 %v1414
        %v1740 = vunpack.c.h.b16 %v1414
        %v1741 = vunpack.c.l.b16 %v1415
        %v1742 = vunpack.c.l.b16 %v1416
        %v1743 = vunpack.c.h.b16 %v1416
        %v1744 = vunpack.c.l.b16 %v1417
        %v1745 = vunpack.c.h.b16 %v1417
        %v1746 = vunpack.c.l.b16 %v1418
        %v1747 = vunpack.c.h.b16 %v1418
        %v1748 = vunpack.c.l.b16 %v1419
        %v1749 = vunpack.c.l.b16 %v1420
        %v1750 = vunpack.c.h.b16 %v1420
        %v1751 = vunpack.c.l.b16 %v1421
        %v1752 = vunpack.c.h.b16 %v1421
        %v1753 = vunpack.c.l.b16 %v1422
        %v1754 = vunpack.c.h.b16 %v1422
        %v1755 = vunpack.c.l.b16 %v1423
        %v1756 = vunpack.c.l.b16 %v1424
        %v1757 = vunpack.c.h.b16 %v1424
        %v1758 = vunpack.c.l.b16 %v1425
        %v1759 = vunpack.c.h.b16 %v1425
        %v1760 = vunpack.c.l.b16 %v1426
        %v1761 = vunpack.c.h.b16 %v1426
        %v1762 = vunpack.c.l.b16 %v1427
        %v1763 = vunpack.c.l.b16 %v1428
        %v1764 = vunpack.c.h.b16 %v1428
        %v1765 = vunpack.c.l.b16 %v1429
        %v1766 = vunpack.c.h.b16 %v1429
        %v1767 = vunpack.c.l.b16 %v1430
        %v1768 = vunpack.c.h.b16 %v1430
        %v1769 = vunpack.c.l.b16 %v1431
        %v1770 = vunpack.c.l.b16 %v1432
        %v1771 = vunpack.c.h.b16 %v1432
        %v1772 = vunpack.c.l.b16 %v1433
        %v1773 = vunpack.c.h.b16 %v1433
        %v1774 = vunpack.c.l.b16 %v1434
        %v1775 = vunpack.c.h.b16 %v1434
        %v1776 = vunpack.c.l.b16 %v1435
        %v1777 = vunpack.c.l.b16 %v1436
        %v1778 = vunpack.c.h.b16 %v1436
        %v1779 = vunpack.c.l.b16 %v1437
        %v1780 = vunpack.c.h.b16 %v1437
        %v1781 = vunpack.c.l.b16 %v1438
        %v1782 = vunpack.c.h.b16 %v1438
        %v1783 = vunpack.c.l.b16 %v1439
        %v1784 = vunpack.c.l.b16 %v1440
        %v1785 = vunpack.c.h.b16 %v1440
        %v1786 = vunpack.c.l.b16 %v1441
        %v1787 = vunpack.c.h.b16 %v1441
        %v1788 = vunpack.c.l.b16 %v1442
        %v1789 = vunpack.c.h.b16 %v1442
        %v1790 = vunpack.c.l.b16 %v1443
        %v1791 = vunpack.c.l.b16 %v1444
        %v1792 = vunpack.c.h.b16 %v1444
        %v1793 = vunpack.c.l.b16 %v1445
        %v1794 = vunpack.c.h.b16 %v1445
        %v1795 = vunpack.c.l.b16 %v1446
        %v1796 = vunpack.c.h.b16 %v1446
        %v1797 = vunpack.c.l.b16 %v1447
        %v1798 = vunpack.c.l.b16 %v1448
        %v1799 = vunpack.c.h.b16 %v1448
        %v1800 = vunpack.c.l.b16 %v1449
        %v1801 = vunpack.c.h.b16 %v1449
        %v1802 = vunpack.c.l.b16 %v1450
        %v1803 = vunpack.c.h.b16 %v1450
        %v1804 = vunpack.c.l.b16 %v1451
        %v1805 = vunpack.c.l.b16 %v1452
        %v1806 = vunpack.c.h.b16 %v1452
        %v1807 = vunpack.c.l.b16 %v1453
        %v1808 = vunpack.c.h.b16 %v1453
        %v1809 = vunpack.c.l.b16 %v1454
        %v1810 = vunpack.c.h.b16 %v1454
        %v1811 = vunpack.c.l.b16 %v1455
        %v1812 = vunpack.c.l.b16 %v1456
        %v1813 = vunpack.c.h.b16 %v1456
        %v1814 = vunpack.c.l.b16 %v1457
        %v1815 = vunpack.c.h.b16 %v1457
        %v1816 = vunpack.c.l.b16 %v1458
        %v1817 = vunpack.c.h.b16 %v1458
        %v1818 = vunpack.c.l.b16 %v1459
        %v1819 = vunpack.c.l.b16 %v1460
        %v1820 = vunpack.c.h.b16 %v1460
        %v1821 = vunpack.c.l.b16 %v1461
        %v1822 = vunpack.c.h.b16 %v1461
        %v1823 = vunpack.c.l.b16 %v1462
        %v1824 = vunpack.c.h.b16 %v1462
        %v1825 = vunpack.c.l.b16 %v1463
        %v1826 = vunpack.c.l.b16 %v1464
        %v1827 = vunpack.c.h.b16 %v1464
        %v1828 = vunpack.c.l.b16 %v1465
        %v1829 = vunpack.c.h.b16 %v1465
        %v1830 = vunpack.c.l.b16 %v1466
        %v1831 = vunpack.c.h.b16 %v1466
        %v1832 = vunpack.c.l.b16 %v1467
        %v1833 = vunpack.c.l.b16 %v1468
        %v1834 = vunpack.c.h.b16 %v1468
        %v1835 = vunpack.c.l.b16 %v1469
        %v1836 = vunpack.c.h.b16 %v1469
        %v1837 = vunpack.c.l.b16 %v1470
        %v1838 = vunpack.c.h.b16 %v1470
        %v1839 = vunpack.c.l.b16 %v1471
        %v1840 = vpack.c.b16 %v1623, %v1616
        %v1841 = vpack.c.b16 %v1624, %v1617
        %v1842 = vpack.c.b16 %v1625, %v1618
        %v1843 = vpack.c.b16 %v1626, %v1619
        %v1844 = vpack.c.b16 %v1627, %v1620
        %v1845 = vpack.c.b16 %v1628, %v1621
        %v1846 = vpack.c.b16 %v1629, %v1622
        %v1847 = vpack.c.b16 %v1637, %v1630
        %v1848 = vpack.c.b16 %v1638, %v1631
        %v1849 = vpack.c.b16 %v1639, %v1632
        %v1850 = vpack.c.b16 %v1640, %v1633
        %v1851 = vpack.c.b16 %v1641, %v1634
        %v1852 = vpack.c.b16 %v1642, %v1635
        %v1853 = vpack.c.b16 %v1643, %v1636
        %v1854 = vpack.c.b16 %v1651, %v1644
        %v1855 = vpack.c.b16 %v1652, %v1645
        %v1856 = vpack.c.b16 %v1653, %v1646
        %v1857 = vpack.c.b16 %v1654, %v1647
        %v1858 = vpack.c.b16 %v1655, %v1648
        %v1859 = vpack.c.b16 %v1656, %v1649
        %v1860 = vpack.c.b16 %v1657, %v1650
        %v1861 = vpack.c.b16 %v1665, %v1658
        %v1862 = vpack.c.b16 %v1666, %v1659
        %v1863 = vpack.c.b16 %v1667, %v1660
        %v1864 = vpack.c.b16 %v1668, %v1661
        %v1865 = vpack.c.b16 %v1669, %v1662
        %v1866 = vpack.c.b16 %v1670, %v1663
        %v1867 = vpack.c.b16 %v1671, %v1664
        %v1868 = vpack.c.b16 %v1679, %v1672
        %v1869 = vpack.c.b16 %v1680, %v1673
        %v1870 = vpack.c.b16 %v1681, %v1674
        %v1871 = vpack.c.b16 %v1682, %v1675
        %v1872 = vpack.c.b16 %v1683, %v1676
        %v1873 = vpack.c.b16 %v1684, %v1677
        %v1874 = vpack.c.b16 %v1685, %v1678
        %v1875 = vpack.c.b16 %v1693, %v1686
        %v1876 = vpack.c.b16 %v1694, %v1687
        %v1877 = vpack.c.b16 %v1695, %v1688
        %v1878 = vpack.c.b16 %v1696, %v1689
        %v1879 = vpack.c.b16 %v1697, %v1690
        %v1880 = vpack.c.b16 %v1698, %v1691
        %v1881 = vpack.c.b16 %v1699, %v1692
        %v1882 = vpack.c.b16 %v1707, %v1700
        %v1883 = vpack.c.b16 %v1708, %v1701
        %v1884 = vpack.c.b16 %v1709, %v1702
        %v1885 = vpack.c.b16 %v1710, %v1703
        %v1886 = vpack.c.b16 %v1711, %v1704
        %v1887 = vpack.c.b16 %v1712, %v1705
        %v1888 = vpack.c.b16 %v1713, %v1706
        %v1889 = vpack.c.b16 %v1721, %v1714
        %v1890 = vpack.c.b16 %v1722, %v1715
        %v1891 = vpack.c.b16 %v1723, %v1716
        %v1892 = vpack.c.b16 %v1724, %v1717
        %v1893 = vpack.c.b16 %v1725, %v1718
        %v1894 = vpack.c.b16 %v1726, %v1719
        %v1895 = vpack.c.b16 %v1727, %v1720
        %v1896 = vpack.c.b16 %v1735, %v1728
        %v1897 = vpack.c.b16 %v1736, %v1729
        %v1898 = vpack.c.b16 %v1737, %v1730
        %v1899 = vpack.c.b16 %v1738, %v1731
        %v1900 = vpack.c.b16 %v1739, %v1732
        %v1901 = vpack.c.b16 %v1740, %v1733
        %v1902 = vpack.c.b16 %v1741, %v1734
        %v1903 = vpack.c.b16 %v1749, %v1742
        %v1904 = vpack.c.b16 %v1750, %v1743
        %v1905 = vpack.c.b16 %v1751, %v1744
        %v1906 = vpack.c.b16 %v1752, %v1745
        %v1907 = vpack.c.b16 %v1753, %v1746
        %v1908 = vpack.c.b16 %v1754, %v1747
        %v1909 = vpack.c.b16 %v1755, %v1748
        %v1910 = vpack.c.b16 %v1763, %v1756
        %v1911 = vpack.c.b16 %v1764, %v1757
        %v1912 = vpack.c.b16 %v1765, %v1758
        %v1913 = vpack.c.b16 %v1766, %v1759
        %v1914 = vpack.c.b16 %v1767, %v1760
        %v1915 = vpack.c.b16 %v1768, %v1761
        %v1916 = vpack.c.b16 %v1769, %v1762
        %v1917 = vpack.c.b16 %v1777, %v1770
        %v1918 = vpack.c.b16 %v1778, %v1771
        %v1919 = vpack.c.b16 %v1779, %v1772
        %v1920 = vpack.c.b16 %v1780, %v1773
        %v1921 = vpack.c.b16 %v1781, %v1774
        %v1922 = vpack.c.b16 %v1782, %v1775
        %v1923 = vpack.c.b16 %v1783, %v1776
        %v1924 = vpack.c.b16 %v1791, %v1784
        %v1925 = vpack.c.b16 %v1792, %v1785
        %v1926 = vpack.c.b16 %v1793, %v1786
        %v1927 = vpack.c.b16 %v1794, %v1787
        %v1928 = vpack.c.b16 %v1795, %v1788
        %v1929 = vpack.c.b16 %v1796, %v1789
        %v1930 = vpack.c.b16 %v1797, %v1790
        %v1931 = vpack.c.b16 %v1805, %v1798
        %v1932 = vpack.c.b16 %v1806, %v1799
        %v1933 = vpack.c.b16 %v1807, %v1800
        %v1934 = vpack.c.b16 %v1808, %v1801
        %v1935 = vpack.c.b16 %v1809, %v1802
        %v1936 = vpack.c.b16 %v1810, %v1803
        %v1937 = vpack.c.b16 %v1811, %v1804
        %v1938 = vpack.c.b16 %v1819, %v1812
        %v1939 = vpack.c.b16 %v1820, %v1813
        %v1940 = vpack.c.b16 %v1821, %v1814
        %v1941 = vpack.c.b16 %v1822, %v1815
        %v1942 = vpack.c.b16 %v1823, %v1816
        %v1943 = vpack.c.b16 %v1824, %v1817
        %v1944 = vpack.c.b16 %v1825, %v1818
        %v1945 = vpack.c.b16 %v1833, %v1826
        %v1946 = vpack.c.b16 %v1834, %v1827
        %v1947 = vpack.c.b16 %v1835, %v1828
        %v1948 = vpack.c.b16 %v1836, %v1829
        %v1949 = vpack.c.b16 %v1837, %v1830
        %v1950 = vpack.c.b16 %v1838, %v1831
        %v1951 = vpack.c.b16 %v1839, %v1832
        %2064 = vmatpush.bf16.msra.mxu0 %v1889
        %2065 = vmatpush.bf16.msra.mxu0 %v1882
        %2066 = vmatpush.bf16.msra.mxu0 %v1875
        %2067 = vmatpush.bf16.msra.mxu0 %v1868
        %2068 = vmatpush.bf16.msra.mxu0 %v1861
        %2069 = vmatpush.bf16.msra.mxu0 %v1854
        %2070 = vmatpush.bf16.msra.mxu0 %v1847
        %2071 = vmatpush.bf16.msra.mxu0 %v1840
        %2072 = vmatmul.bf16.gmra.mxu0 %v1342
        %v2073 = vpop.f32.mrf.mxu0
        %v2074 = vadd.f32 %v1474, %v2073
        %v2075 = vpop.f32.mrf.mxu0
        %2076 = vdwg.mxu0
        %2077 = vmatpush.bf16.msra.mxu0 %v1945
        %2078 = vmatpush.bf16.msra.mxu0 %v1938
        %2079 = vmatpush.bf16.msra.mxu0 %v1931
        %2080 = vmatpush.bf16.msra.mxu0 %v1924
        %2081 = vmatpush.bf16.msra.mxu0 %v1917
        %2082 = vmatpush.bf16.msra.mxu0 %v1910
        %2083 = vmatpush.bf16.msra.mxu0 %v1903
        %2084 = vmatpush.bf16.msra.mxu0 %v1896
        %2085 = vmatmul.bf16.gmra.mxu0 %v1343
        %v2086 = vpop.f32.mrf.mxu0
        %v2087 = vadd.f32 %v2074, %v2086
        %v2088 = vpop.f32.mrf.mxu0
        %2089 = vdwg.mxu0
        %2090 = vmatpush.bf16.msra.mxu0 %v1890
        %2091 = vmatpush.bf16.msra.mxu0 %v1883
        %2092 = vmatpush.bf16.msra.mxu0 %v1876
        %2093 = vmatpush.bf16.msra.mxu0 %v1869
        %2094 = vmatpush.bf16.msra.mxu0 %v1862
        %2095 = vmatpush.bf16.msra.mxu0 %v1855
        %2096 = vmatpush.bf16.msra.mxu0 %v1848
        %2097 = vmatpush.bf16.msra.mxu0 %v1841
        %2098 = vmatmul.bf16.gmra.mxu0 %v1342
        %v2099 = vpop.f32.mrf.mxu0
        %v2100 = vadd.f32 %v1475, %v2099
        %v2101 = vpop.f32.mrf.mxu0
        %2102 = vdwg.mxu0
        %2103 = vmatpush.bf16.msra.mxu0 %v1946
        %2104 = vmatpush.bf16.msra.mxu0 %v1939
        %2105 = vmatpush.bf16.msra.mxu0 %v1932
        %2106 = vmatpush.bf16.msra.mxu0 %v1925
        %2107 = vmatpush.bf16.msra.mxu0 %v1918
        %2108 = vmatpush.bf16.msra.mxu0 %v1911
        %2109 = vmatpush.bf16.msra.mxu0 %v1904
        %2110 = vmatpush.bf16.msra.mxu0 %v1897
        %2111 = vmatmul.bf16.gmra.mxu0 %v1343
        %v2112 = vpop.f32.mrf.mxu0
        %v2113 = vadd.f32 %v2100, %v2112
        %v2114 = vpop.f32.mrf.mxu0
        %2115 = vdwg.mxu0
        %2116 = vmatpush.bf16.msra.mxu0 %v1891
        %2117 = vmatpush.bf16.msra.mxu0 %v1884
        %2118 = vmatpush.bf16.msra.mxu0 %v1877
        %2119 = vmatpush.bf16.msra.mxu0 %v1870
        %2120 = vmatpush.bf16.msra.mxu0 %v1863
        %2121 = vmatpush.bf16.msra.mxu0 %v1856
        %2122 = vmatpush.bf16.msra.mxu0 %v1849
        %2123 = vmatpush.bf16.msra.mxu0 %v1842
        %2124 = vmatmul.bf16.gmra.mxu0 %v1342
        %v2125 = vpop.f32.mrf.mxu0
        %v2126 = vadd.f32 %v1476, %v2125
        %v2127 = vpop.f32.mrf.mxu0
        %2128 = vdwg.mxu0
        %2129 = vmatpush.bf16.msra.mxu0 %v1947
        %2130 = vmatpush.bf16.msra.mxu0 %v1940
        %2131 = vmatpush.bf16.msra.mxu0 %v1933
        %2132 = vmatpush.bf16.msra.mxu0 %v1926
        %2133 = vmatpush.bf16.msra.mxu0 %v1919
        %2134 = vmatpush.bf16.msra.mxu0 %v1912
        %2135 = vmatpush.bf16.msra.mxu0 %v1905
        %2136 = vmatpush.bf16.msra.mxu0 %v1898
        %2137 = vmatmul.bf16.gmra.mxu0 %v1343
        %v2138 = vpop.f32.mrf.mxu0
        %v2139 = vadd.f32 %v2126, %v2138
        %v2140 = vpop.f32.mrf.mxu0
        %2141 = vdwg.mxu0
        %2142 = vmatpush.bf16.msra.mxu0 %v1892
        %2143 = vmatpush.bf16.msra.mxu0 %v1885
        %2144 = vmatpush.bf16.msra.mxu0 %v1878
        %2145 = vmatpush.bf16.msra.mxu0 %v1871
        %2146 = vmatpush.bf16.msra.mxu0 %v1864
        %2147 = vmatpush.bf16.msra.mxu0 %v1857
        %2148 = vmatpush.bf16.msra.mxu0 %v1850
        %2149 = vmatpush.bf16.msra.mxu0 %v1843
        %2150 = vmatmul.bf16.gmra.mxu0 %v1342
        %v2151 = vpop.f32.mrf.mxu0
        %v2152 = vadd.f32 %v1477, %v2151
        %v2153 = vpop.f32.mrf.mxu0
        %2154 = vdwg.mxu0
        %2155 = vmatpush.bf16.msra.mxu0 %v1948
        %2156 = vmatpush.bf16.msra.mxu0 %v1941
        %2157 = vmatpush.bf16.msra.mxu0 %v1934
        %2158 = vmatpush.bf16.msra.mxu0 %v1927
        %2159 = vmatpush.bf16.msra.mxu0 %v1920
        %2160 = vmatpush.bf16.msra.mxu0 %v1913
        %2161 = vmatpush.bf16.msra.mxu0 %v1906
        %2162 = vmatpush.bf16.msra.mxu0 %v1899
        %2163 = vmatmul.bf16.gmra.mxu0 %v1343
        %v2164 = vpop.f32.mrf.mxu0
        %v2165 = vadd.f32 %v2152, %v2164
        %v2166 = vpop.f32.mrf.mxu0
        %2167 = vdwg.mxu0
        %2168 = vmatpush.bf16.msra.mxu0 %v1893
        %2169 = vmatpush.bf16.msra.mxu0 %v1886
        %2170 = vmatpush.bf16.msra.mxu0 %v1879
        %2171 = vmatpush.bf16.msra.mxu0 %v1872
        %2172 = vmatpush.bf16.msra.mxu0 %v1865
        %2173 = vmatpush.bf16.msra.mxu0 %v1858
        %2174 = vmatpush.bf16.msra.mxu0 %v1851
        %2175 = vmatpush.bf16.msra.mxu0 %v1844
        %2176 = vmatmul.bf16.gmra.mxu0 %v1342
        %v2177 = vpop.f32.mrf.mxu0
        %v2178 = vadd.f32 %v1478, %v2177
        %v2179 = vpop.f32.mrf.mxu0
        %2180 = vdwg.mxu0
        %2181 = vmatpush.bf16.msra.mxu0 %v1949
        %2182 = vmatpush.bf16.msra.mxu0 %v1942
        %2183 = vmatpush.bf16.msra.mxu0 %v1935
        %2184 = vmatpush.bf16.msra.mxu0 %v1928
        %2185 = vmatpush.bf16.msra.mxu0 %v1921
        %2186 = vmatpush.bf16.msra.mxu0 %v1914
        %2187 = vmatpush.bf16.msra.mxu0 %v1907
        %2188 = vmatpush.bf16.msra.mxu0 %v1900
        %2189 = vmatmul.bf16.gmra.mxu0 %v1343
        %v2190 = vpop.f32.mrf.mxu0
        %v2191 = vadd.f32 %v2178, %v2190
        %v2192 = vpop.f32.mrf.mxu0
        %2193 = vdwg.mxu0
        %2194 = vmatpush.bf16.msra.mxu0 %v1894
        %2195 = vmatpush.bf16.msra.mxu0 %v1887
        %2196 = vmatpush.bf16.msra.mxu0 %v1880
        %2197 = vmatpush.bf16.msra.mxu0 %v1873
        %2198 = vmatpush.bf16.msra.mxu0 %v1866
        %2199 = vmatpush.bf16.msra.mxu0 %v1859
        %2200 = vmatpush.bf16.msra.mxu0 %v1852
        %2201 = vmatpush.bf16.msra.mxu0 %v1845
        %2202 = vmatmul.bf16.gmra.mxu0 %v1342
        %v2203 = vpop.f32.mrf.mxu0
        %v2204 = vadd.f32 %v1479, %v2203
        %v2205 = vpop.f32.mrf.mxu0
        %2206 = vdwg.mxu0
        %2207 = vmatpush.bf16.msra.mxu0 %v1950
        %2208 = vmatpush.bf16.msra.mxu0 %v1943
        %2209 = vmatpush.bf16.msra.mxu0 %v1936
        %2210 = vmatpush.bf16.msra.mxu0 %v1929
        %2211 = vmatpush.bf16.msra.mxu0 %v1922
        %2212 = vmatpush.bf16.msra.mxu0 %v1915
        %2213 = vmatpush.bf16.msra.mxu0 %v1908
        %2214 = vmatpush.bf16.msra.mxu0 %v1901
        %2215 = vmatmul.bf16.gmra.mxu0 %v1343
        %v2216 = vpop.f32.mrf.mxu0
        %v2217 = vadd.f32 %v2204, %v2216
        %v2218 = vpop.f32.mrf.mxu0
        %2219 = vdwg.mxu0
        %2220 = vmatpush.bf16.msra.mxu0 %v1895
        %2221 = vmatpush.bf16.msra.mxu0 %v1888
        %2222 = vmatpush.bf16.msra.mxu0 %v1881
        %2223 = vmatpush.bf16.msra.mxu0 %v1874
        %2224 = vmatpush.bf16.msra.mxu0 %v1867
        %2225 = vmatpush.bf16.msra.mxu0 %v1860
        %2226 = vmatpush.bf16.msra.mxu0 %v1853
        %2227 = vmatpush.bf16.msra.mxu0 %v1846
        %2228 = vmatmul.bf16.gmra.mxu0 %v1342
        %v2229 = vpop.f32.mrf.mxu0
        %v2230 = vadd.f32 %v1480, %v2229
        %v2231 = vpop.f32.mrf.mxu0
        %2232 = vdwg.mxu0
        %2233 = vmatpush.bf16.msra.mxu0 %v1951
        %2234 = vmatpush.bf16.msra.mxu0 %v1944
        %2235 = vmatpush.bf16.msra.mxu0 %v1937
        %2236 = vmatpush.bf16.msra.mxu0 %v1930
        %2237 = vmatpush.bf16.msra.mxu0 %v1923
        %2238 = vmatpush.bf16.msra.mxu0 %v1916
        %2239 = vmatpush.bf16.msra.mxu0 %v1909
        %2240 = vmatpush.bf16.msra.mxu0 %v1902
        %2241 = vmatmul.bf16.gmra.mxu0 %v1343
        %v2242 = vpop.f32.mrf.mxu0
        %v2243 = vadd.f32 %v2230, %v2242
        %v2244 = vpop.f32.mrf.mxu0
        %2245 = vdwg.mxu0
        %v2246 = vsub.f32 0.0, %v2087
        %v2247 = vsub.f32 0.0, %v2113
        %v2248 = vsub.f32 0.0, %v2139
        %v2249 = vsub.f32 0.0, %v2165
        %v2250 = vsub.f32 0.0, %v2191
        %v2251 = vsub.f32 0.0, %v2217
        %v2252 = vsub.f32 0.0, %v2243
        %v2253 = vmul.f32 %v2246, 1.442695
        %v2254 = vpow.pop %v2253
        %v2255 = vmul.f32 %v2247, 1.442695
        %v2256 = vpow.pop %v2255
        %v2257 = vmul.f32 %v2248, 1.442695
        %v2258 = vpow.pop %v2257
        %v2259 = vmul.f32 %v2249, 1.442695
        %v2260 = vpow.pop %v2259
        %v2261 = vmul.f32 %v2250, 1.442695
        %v2262 = vpow.pop %v2261
        %v2263 = vmul.f32 %v2251, 1.442695
        %v2264 = vpow.pop %v2263
        %v2265 = vmul.f32 %v2252, 1.442695
        %v2266 = vpow.pop %v2265
        %v2267 = vadd.f32 %v2254, 1.0
        %v2268 = vadd.f32 %v2256, 1.0
        %v2269 = vadd.f32 %v2258, 1.0
        %v2270 = vadd.f32 %v2260, 1.0
        %v2271 = vadd.f32 %v2262, 1.0
        %v2272 = vadd.f32 %v2264, 1.0
        %v2273 = vadd.f32 %v2266, 1.0
        %v2274 = vrcp.pop %v2267
        %v2275 = vrcp.pop %v2268
        %v2276 = vrcp.pop %v2269
        %v2277 = vrcp.pop %v2270
        %v2278 = vrcp.pop %v2271
        %v2279 = vrcp.pop %v2272
        %v2280 = vrcp.pop %v2273
        %v2281 = vpack.c.bf16 %v2275, %v2274
        %v2282 = vpack.c.bf16 %v2277, %v2276
        %v2283 = vpack.c.bf16 %v2279, %v2278
        %v2284 = vpack.c.bf16 %v2280, %v2280
        %2285 = vst [vmem:[%s271] sm:$0xff] %v2281
        %2286 = vst [vmem:[%s271 + $0x8] sm:$0xff] %v2282
        %2287 = vst [vmem:[%s271 + $0x10] sm:$0xff] %v2283
        %vm2288 = vcmask 125952
        %2289 = vst.msk [vmem:[%s271 + $0x18] sm:$0xf] %vm2288, %v2284
        %s2290 = sand.u32 %s181, 1
        %s2291 = scalar_lea.sflag [#allocation3], %s2290
        %s2292 = sand.u32 %s181, 1
        %s2293 = smul.addr %s2292, 28
        %s2294 = scalar_lea.vmem [#allocation2], %s2293
        // Predicated region
        $region49: #{autoencoder_forward.1} parent=47 // pred_check
          %p2295 = pneg %p191
        $region50: #{autoencoder_forward.1} parent=47 // pred_check_branch
          %2297 = sbr.rel (%p2295) target = $region52
        $region51: #{autoencoder_forward.1} parent=47 // pred_region
          %2299 = vsyncadd %s2291, 0
          %s2300 = smul.addr %s21, 7
          %s2301 = smul.addr %s2300, 4
          %s2302 = scalar_lea.hbm %s7, %s2301
          %s2304 = sshll.u32 %s2294, 4
          %s2305 = int_to_ptr.vmem [resolvable:$true] %s2304
          %s2306 = sshll.u32 %s2302, 4
          %s2307 = int_to_ptr.hbm [resolvable:$true] %s2306
          %2309 = dma.vmem_to_hbm [thread:$0]  %s2305, 448, %s2307, %s2291
        $region52: #{autoencoder_forward.1} parent=47 // pred_fallthru
          _
      $region48: #{autoencoder_forward.1} parent=5 // pred_fallthru
        _
      %p2310 = scmp.le.s32.totalorder 2, %s16
      // Predicated region
      $region53: #{autoencoder_forward.1} parent=5 // pred_check
        %p2311 = pneg %p2310
      $region54: #{autoencoder_forward.1} parent=5 // pred_check_branch
        %2313 = sbr.rel (%p2311) target = $region56
      $region55: #{autoencoder_forward.1} parent=5 // pred_region
        %s2314 = ssub.s32 %s16, 2
        // Predicated region
        $region57: #{autoencoder_forward.1} parent=55 // pred_check
          %p2315 = pneg %p197
        $region58: #{autoencoder_forward.1} parent=55 // pred_check_branch
          %2317 = sbr.rel (%p2315) target = $region60
        $region59: #{autoencoder_forward.1} parent=55 // pred_region
          %s2318 = sand.u32 %s182, 1
          %s2319 = scalar_lea.sflag [#allocation3], %s2318
          %s2320 = sand.u32 %s182, 1
          %s2321 = smul.addr %s2320, 28
          %s2322 = scalar_lea.vmem [#allocation2], %s2321
          %2324 = dma.done %s2319, 448
        $region60: #{autoencoder_forward.1} parent=55 // pred_fallthru
          _
      $region56: #{autoencoder_forward.1} parent=5 // pred_fallthru
        _
    $region6: #{autoencoder_forward.1} parent=1 // loop_footer
      %s20 = sadd.s32 1, %s16
    $region7: #{autoencoder_forward.1} parent=1 // loop_footer_branch
      %15 = sbr.rel target = $region3
    $region8: #{autoencoder_forward.1} parent=1 // loop_exit
      _
    %2325 = vsyncpa [#allocation3], 1
    %s2326 = scalar_lea.sflag [#allocation3], 1
    %2327 = vsyncpa %s2326, 1

</llo_original>
